<compile_context>
chip_gen: v7x
topology: tpu7x:2x2x1
jax: 0.10.0
libtpu: 0.0.40
codegen_flags: <defaults>
</compile_context>

<pallas_src>
import functools
import math

import jax
import jax.numpy as jnp
from jax import lax
from jax.experimental import pallas as pl
from jax.experimental.pallas import tpu as pltpu


def _vmem_limit_bytes():
    """Per-generation VMEM budget with headroom for Mosaic internal scratch."""
    try:
        phys = int(pltpu.get_tpu_info().vmem_capacity_bytes)
    except Exception:
        phys = 64 * 1024 * 1024            # conservative (v7x per-TC size)
    return min(phys - 16 * 1024 * 1024, 100 * 1024 * 1024)


def _pick_q_chunk(seq_len, vmem_limit):
    """Largest chunk whose f32 logits+exp tiles (~2*qc*S*4B) fit ~1/4 of VMEM."""
    budget = vmem_limit // 4
    qc = seq_len   # TODO(synk): ragged S with no nice divisor -> single chunk
    for c in (1024, 512, 256, 128, 64, 32, 16, 8):
        if seq_len % c == 0:
            qc = c
            if 2 * c * seq_len * 4 <= budget:
                break
    return qc


def _pick_heads_per_step(n_heads, d_head):
    for hp in (4, 2, 1):
        if n_heads % hp == 0 and hp * d_head <= 256:
            return hp
    return 1


def _self_attn_kernel(x_ref, wqkv_ref, bqkv_ref, wo_ref, bo_ref, o_ref,
                      acc_ref, oh_ref, qs_ref,
                      *, d_head, heads_per_step, causal, q_chunk):
    g = pl.program_id(1)

    # Initialize the per-batch output accumulator on the first head group.
    @pl.when(g == 0)
    def _():
        acc_ref[...] = jnp.zeros_like(acc_ref)

    x = x_ref[0]                                   # (S, D), input dtype
    seq = x.shape[0]
    dh = d_head
    hp = heads_per_step
    cdt = x.dtype                                  # MXU operand dtype (bf16 ok)
    scale = 1.0 / math.sqrt(dh)
    n_chunks = seq // q_chunk
    qk_dims = (((1,), (1,)), ((), ()))             # contract last dims (no k.T)

    # One fused projection for all hp heads of this group: x @ (D, hp*3*dh).
    # Bias added in f32; operands are down-cast per head below.
    qkv = jnp.dot(x, wqkv_ref[0], preferred_element_type=jnp.float32) + bqkv_ref[0]

    # Hoisted triangular mask for the (q_chunk, q_chunk) diagonal block; the
    # diagonal itself is never masked, so scaling q first == mask-before-scale.
    if causal:
        tri = (lax.broadcasted_iota(jnp.int32, (q_chunk, q_chunk), 1)
               > lax.broadcasted_iota(jnp.int32, (q_chunk, q_chunk), 0))

    for j in range(hp):                            # static tiny loop, hp <= 4
        base = j * 3 * dh
        # Fold 1/sqrt(dh) into q in f32, then down-cast operands to x.dtype.
        q = (qkv[:, base:base + dh] * scale).astype(cdt)
        k = qkv[:, base + dh:base + 2 * dh].astype(cdt)
        v = qkv[:, base + 2 * dh:base + 3 * dh].astype(cdt)
        oh_view = oh_ref.at[:, j * dh:(j + 1) * dh]

        if causal:
            # Static unroll so K/V can be statically shrunk to the visible
            # prefix; only the diagonal block gets the iota/where mask.
            for ci in range(n_chunks):
                r0 = ci * q_chunk
                qc = q[r0:r0 + q_chunk, :]
                kd = k[r0:r0 + q_chunk, :]
                vd = v[r0:r0 + q_chunk, :]
                s_d = lax.dot_general(qc, kd, qk_dims,
                                      preferred_element_type=jnp.float32)
                s_d = jnp.where(tri, jnp.float32(-1e30), s_d)
                if ci == 0:
                    m = jnp.max(s_d, axis=-1, keepdims=True)
                    e_d = jnp.exp(s_d - m)
                    inv = pl.reciprocal(jnp.sum(e_d, axis=-1, keepdims=True),
                                        approx=True)
                    oh = jnp.dot((e_d * inv).astype(cdt), vd,
                                 preferred_element_type=jnp.float32)
                else:
                    kv_ = k[:r0, :]
                    vv_ = v[:r0, :]
                    s_v = lax.dot_general(qc, kv_, qk_dims,
                                          preferred_element_type=jnp.float32)
                    m = jnp.maximum(jnp.max(s_v, axis=-1, keepdims=True),
                                    jnp.max(s_d, axis=-1, keepdims=True))
                    e_v = jnp.exp(s_v - m)
                    e_d = jnp.exp(s_d - m)
                    inv = pl.reciprocal(
                        jnp.sum(e_v, axis=-1, keepdims=True)
                        + jnp.sum(e_d, axis=-1, keepdims=True), approx=True)
                    oh = (jnp.dot((e_v * inv).astype(cdt), vv_,
                                  preferred_element_type=jnp.float32)
                          + jnp.dot((e_d * inv).astype(cdt), vd,
                                    preferred_element_type=jnp.float32))
                oh_view[r0:r0 + q_chunk, :] = oh.astype(oh_ref.dtype)
        elif n_chunks == 1:
            s = lax.dot_general(q, k, qk_dims, preferred_element_type=jnp.float32)
            m = jnp.max(s, axis=-1, keepdims=True)
            e = jnp.exp(s - m)
            inv = pl.reciprocal(jnp.sum(e, axis=-1, keepdims=True), approx=True)
            oh = jnp.dot((e * inv).astype(cdt), v,
                         preferred_element_type=jnp.float32)
            oh_view[...] = oh.astype(oh_ref.dtype)
        else:
            # Dynamic chunk loop (no code inflation); q staged in VMEM so the
            # per-chunk slice is a ref pl.ds with a multiple_of-aligned start.
            qs_ref[...] = q

            @pl.loop(0, n_chunks)
            def _(ci):
                r0 = pl.multiple_of(ci * q_chunk, q_chunk)
                qc = qs_ref[pl.ds(r0, q_chunk), :]
                s = lax.dot_general(qc, k, qk_dims,
                                    preferred_element_type=jnp.float32)
                m = jnp.max(s, axis=-1, keepdims=True)
                e = jnp.exp(s - m)
                inv = pl.reciprocal(jnp.sum(e, axis=-1, keepdims=True),
                                    approx=True)
                oh = jnp.dot((e * inv).astype(cdt), v,
                             preferred_element_type=jnp.float32)
                oh_view[pl.ds(r0, q_chunk), :] = oh.astype(oh_ref.dtype)

    # One out_proj contribution for the whole head group (K = hp*dh),
    # accumulated across head groups in the f32 scratch.
    acc_ref[...] += jnp.dot(oh_ref[...], wo_ref[0],
                            preferred_element_type=jnp.float32)

    # Finalize on the last head group: add the out_proj bias once, write out.
    @pl.when(g == pl.num_programs(1) - 1)
    def _():
        o_ref[0] = (acc_ref[...] + bo_ref[...].astype(jnp.float32)).astype(o_ref.dtype)


def self_attention_pallas(x, w_in, b_in, w_out, b_out, *, n_heads,
                          causal_mask=False, q_chunk=None, heads_per_step=None):
    """x: (B, S, D); w_in: (D, 3D); b_in: (3D,); w_out: (D, D); b_out: (D,).

    Weight layout is (in_features, out_features), i.e. nn.Linear.weight.T.
    For best MXU throughput pass x and the weights in bfloat16; attention
    matmul operands stay in x.dtype with f32 accumulation.
    """
    B, S, D = x.shape
    assert D % n_heads == 0
    H = n_heads
    dh = D // H

    vmem_limit = _vmem_limit_bytes()
    if q_chunk is None:
        q_chunk = _pick_q_chunk(S, vmem_limit)
    assert S % q_chunk == 0, "q_chunk must divide the sequence length"
    if heads_per_step is None:
        heads_per_step = _pick_heads_per_step(H, dh)
    hp = heads_per_step
    assert H % hp == 0
    G = H // hp

    # ---- Head-group-major weight packing (wrapper-side, lane-dense tiles) --
    # Per-head columns ordered [q | k | v]; heads of a group adjacent.
    w_qkv = w_in.reshape(D, 3, H, dh)
    w_qkv = jnp.transpose(w_qkv, (2, 0, 1, 3)).reshape(H, D, 3 * dh)
    w_qkv = jnp.transpose(w_qkv.reshape(G, hp, D, 3 * dh), (0, 2, 1, 3))
    w_qkv = w_qkv.reshape(G, D, hp * 3 * dh)

    b_qkv = jnp.transpose(b_in.reshape(3, H, dh), (1, 0, 2)).reshape(H, 3 * dh)
    b_qkv = b_qkv.reshape(G, 1, hp * 3 * dh)

    w_o = w_out.reshape(G, hp * dh, D)          # rows are already head-major
    b_o = b_out.reshape(1, D)

    kernel = functools.partial(
        _self_attn_kernel, d_head=dh, heads_per_step=hp,
        causal=causal_mask, q_chunk=q_chunk)

    return pl.pallas_call(
        kernel,
        out_shape=jax.ShapeDtypeStruct((B, S, D), x.dtype),
        grid=(B, G),                                   # head-group axis last
        in_specs=[
            pl.BlockSpec((1, S, D), lambda b, g: (b, 0, 0)),               # x
            pl.BlockSpec((1, D, hp * 3 * dh), lambda b, g: (g, 0, 0)),     # w_qkv
            pl.BlockSpec((1, 1, hp * 3 * dh), lambda b, g: (g, 0, 0)),     # b_qkv
            pl.BlockSpec((1, hp * dh, D), lambda b, g: (g, 0, 0)),         # w_out
            pl.BlockSpec((1, D), lambda b, g: (0, 0)),                     # b_out
        ],
        out_specs=pl.BlockSpec((1, S, D), lambda b, g: (b, 0, 0)),
        scratch_shapes=[
            pltpu.VMEM((S, D), jnp.float32),       # output accumulator (f32)
            pltpu.VMEM((S, hp * dh), x.dtype),     # per-group attention output
            pltpu.VMEM((S, dh), x.dtype),          # staged q for dynamic loop
        ],
        compiler_params=pltpu.CompilerParams(
            dimension_semantics=("parallel", "arbitrary"),
            vmem_limit_bytes=vmem_limit),
    )(x, w_qkv, b_qkv, w_o, b_o)


def self_attention_ref(x, w_in, b_in, w_out, b_out, *, n_heads, causal_mask=False):
    """Pure-JAX reference mirroring the PyTorch forward exactly."""
    B, S, D = x.shape
    dh = D // n_heads
    qkv = x @ w_in + b_in                           # (B, S, 3D)
    q, k, v = jnp.split(qkv, 3, axis=-1)

    def split_heads(t):
        return t.reshape(B, S, n_heads, dh).transpose(0, 2, 1, 3)

    q, k, v = split_heads(q), split_heads(k), split_heads(v)
    w = q @ jnp.swapaxes(k, -1, -2)                 # (B, H, S, S)
    if causal_mask:
        mask = jnp.triu(jnp.ones((S, S), dtype=bool), 1)
        w = jnp.where(mask, -jnp.inf, w)
    w = w / math.sqrt(dh)
    w = jax.nn.softmax(w, axis=-1)
    out = (w @ v).transpose(0, 2, 1, 3).reshape(B, S, D)
    return out @ w_out + b_out


if __name__ == "__main__":
    key = jax.random.PRNGKey(0)

    def make_inputs(k, B, S, D):
        kx, k1, k2, k3, k4 = jax.random.split(k, 5)
        x = jax.random.normal(kx, (B, S, D), dtype=jnp.float32)
        bound = 1.0 / math.sqrt(D)
        w_in = jax.random.uniform(k1, (D, 3 * D), jnp.float32, -bound, bound)
        b_in = jax.random.uniform(k2, (3 * D,), jnp.float32, -bound, bound)
        w_out = jax.random.uniform(k3, (D, D), jnp.float32, -bound, bound)
        b_out = jax.random.uniform(k4, (D,), jnp.float32, -bound, bound)
        return x, w_in, b_in, w_out, b_out

    k1, k2 = jax.random.split(key)
    # (key, B, S, D, H, explicit q_chunk): second config exercises the
    # multi-chunk causal path, the pl.loop non-causal path and multi-group acc.
    configs = [
        (k1, 2, 8, 32, 4, None),
        (k2, 1, 128, 64, 8, 32),
    ]

    ok = True
    for kk, B, S, D, H, qc in configs:
        x, w_in, b_in, w_out, b_out = make_inputs(kk, B, S, D)
        for causal in (False, True):
            y = jax.block_until_ready(
                self_attention_pallas(x, w_in, b_in, w_out, b_out,
                                      n_heads=H, causal_mask=causal,
                                      q_chunk=qc))
            y_ref = self_attention_ref(x, w_in, b_in, w_out, b_out,
                                       n_heads=H, causal_mask=causal)
            # Tolerance accounts for the EUP approximate reciprocal in softmax.
            ok &= bool(jnp.allclose(y, y_ref, atol=2e-3, rtol=2e-3))

    print("KERNEL_OK" if ok else "KERNEL_MISMATCH")
</pallas_src>

<mosaic_0001>
module attributes {stable_mosaic.version = 11 : i64} {
  func.func @_self_attn_kernel(%arg0: i32, %arg1: i32, %arg2: memref<1x8x32xf32, #tpu.memory_space<vmem>>, %arg3: memref<1x32x96xf32, #tpu.memory_space<vmem>>, %arg4: memref<1x1x96xf32, #tpu.memory_space<vmem>>, %arg5: memref<1x32x32xf32, #tpu.memory_space<vmem>>, %arg6: memref<1x32xf32, #tpu.memory_space<vmem>>, %arg7: memref<1x8x32xf32, #tpu.memory_space<vmem>>, %arg8: memref<8x32xf32, #tpu.memory_space<vmem>>, %arg9: memref<8x32xf32, #tpu.memory_space<vmem>>, %arg10: memref<8x8xf32, #tpu.memory_space<vmem>>) attributes {dimension_semantics = [#tpu.dimension_semantics<parallel>, #tpu.dimension_semantics<arbitrary>], iteration_bounds = array<i64: 2, 1>, scalar_prefetch = 0 : i64, scratch_operands = 3 : i64, tpu.core_type = #tpu.core_type<tc>, window_params = [{transform_indices = @transform_0, window_bounds = array<i64: 1, 8, 32>}, {transform_indices = @transform_1, window_bounds = array<i64: 1, 32, 96>}, {transform_indices = @transform_2, window_bounds = array<i64: 1, 1, 96>}, {transform_indices = @transform_3, window_bounds = array<i64: 1, 32, 32>}, {pipeline_mode = #tpu.pipeline_mode<synchronous>, transform_indices = @transform_4, window_bounds = array<i64: 1, 32>}, {transform_indices = @transform_5, window_bounds = array<i64: 1, 8, 32>}]} {
    %c0_i32 = arith.constant 0 : i32
    %0 = arith.cmpi eq, %arg1, %c0_i32 : i32
    %1 = arith.extui %0 : i1 to i32
    %c0_i32_0 = arith.constant 0 : i32
    %2 = arith.cmpi ne, %1, %c0_i32_0 : i32
    scf.if %2 {
      %cst_46 = arith.constant 0.000000e+00 : f32
      %94 = vector.broadcast %cst_46 : f32 to vector<8x32xf32>
      %c0_47 = arith.constant 0 : index
      %c0_48 = arith.constant 0 : index
      %95 = vector.load %arg8[%c0_47, %c0_48] : memref<8x32xf32, #tpu.memory_space<vmem>>, vector<8x32xf32>
      tpu.vector_store %arg8[%c0_47, %c0_48], %94 {strides = array<i32>} : memref<8x32xf32, #tpu.memory_space<vmem>>, vector<8x32xf32>,
    } else {
    }
    %c0 = arith.constant 0 : index
    %c0_1 = arith.constant 0 : index
    %c0_2 = arith.constant 0 : index
    %3 = vector.load %arg2[%c0, %c0_1, %c0_2] : memref<1x8x32xf32, #tpu.memory_space<vmem>>, vector<1x8x32xf32>
    %4 = vector.shape_cast %3 : vector<1x8x32xf32> to vector<8x32xf32>
    %c0_3 = arith.constant 0 : index
    %c0_4 = arith.constant 0 : index
    %c0_5 = arith.constant 0 : index
    %5 = vector.load %arg3[%c0_3, %c0_4, %c0_5] : memref<1x32x96xf32, #tpu.memory_space<vmem>>, vector<1x32x96xf32>
    %6 = vector.shape_cast %5 : vector<1x32x96xf32> to vector<32x96xf32>
    %cst = arith.constant dense<0.000000e+00> : vector<8x96xf32>
    %7 = tpu.matmul %4, %6, %cst {dimension_numbers = #tpu.dot_dimension_numbers<[1], [0], [0], [1], [0, 0, 1, 1], [], []>} : vector<8x32xf32>, vector<32x96xf32>, vector<8x96xf32> -> vector<8x96xf32>
    %c0_6 = arith.constant 0 : index
    %c0_7 = arith.constant 0 : index
    %c0_8 = arith.constant 0 : index
    %8 = vector.load %arg4[%c0_6, %c0_7, %c0_8] : memref<1x1x96xf32, #tpu.memory_space<vmem>>, vector<1x1x96xf32>
    %9 = vector.shape_cast %8 : vector<1x1x96xf32> to vector<1x96xf32>
    %10 = vector.broadcast %9 : vector<1x96xf32> to vector<8x96xf32>
    %11 = arith.addf %7, %10 : vector<8x96xf32>
    %12 = vector.extract_strided_slice %11 {offsets = [0, 0], sizes = [8, 8], strides = [1, 1]} : vector<8x96xf32> to vector<8x8xf32>
    %cst_9 = arith.constant 0.353553385 : f32
    %13 = vector.broadcast %cst_9 : f32 to vector<8x8xf32>
    %14 = arith.mulf %12, %13 : vector<8x8xf32>
    %15 = vector.extract_strided_slice %11 {offsets = [0, 8], sizes = [8, 8], strides = [1, 1]} : vector<8x96xf32> to vector<8x8xf32>
    %16 = vector.extract_strided_slice %11 {offsets = [0, 16], sizes = [8, 8], strides = [1, 1]} : vector<8x96xf32> to vector<8x8xf32>
    %cst_10 = arith.constant dense<0.000000e+00> : vector<8x8xf32>
    %17 = tpu.matmul %14, %15, %cst_10 {dimension_numbers = #tpu.dot_dimension_numbers<[1], [1], [0], [0], [0, 0, 1, 0], [], []>} : vector<8x8xf32>, vector<8x8xf32>, vector<8x8xf32> -> vector<8x8xf32>
    %cst_11 = arith.constant dense<0xFF800000> : vector<8xf32>
    %18 = vector.multi_reduction <maximumf>, %17, %cst_11 [1] : vector<8x8xf32> to vector<8xf32>
    %19 = vector.shape_cast %18 : vector<8xf32> to vector<8x1xf32>
    %20 = vector.broadcast %19 : vector<8x1xf32> to vector<8x8xf32>
    %21 = arith.subf %17, %20 : vector<8x8xf32>
    %22 = math.exp %21 : vector<8x8xf32>
    %cst_12 = arith.constant dense<0.000000e+00> : vector<8xf32>
    %23 = vector.multi_reduction <add>, %22, %cst_12 [1] : vector<8x8xf32> to vector<8xf32>
    %24 = vector.shape_cast %23 : vector<8xf32> to vector<8x1xf32>
    %25 = tpu.reciprocal %24 {approx = true} : vector<8x1xf32> -> vector<8x1xf32>
    %26 = vector.broadcast %25 : vector<8x1xf32> to vector<8x8xf32>
    %27 = arith.mulf %22, %26 : vector<8x8xf32>
    %cst_13 = arith.constant dense<0.000000e+00> : vector<8x8xf32>
    %28 = tpu.matmul %27, %16, %cst_13 {dimension_numbers = #tpu.dot_dimension_numbers<[1], [0], [0], [1], [0, 0, 1, 1], [], []>} : vector<8x8xf32>, vector<8x8xf32>, vector<8x8xf32> -> vector<8x8xf32>
    %c0_14 = arith.constant 0 : index
    %c0_15 = arith.constant 0 : index
    %29 = vector.load %arg9[%c0_14, %c0_15] : memref<8x32xf32, #tpu.memory_space<vmem>>, vector<8x8xf32>
    tpu.vector_store %arg9[%c0_14, %c0_15], %28 {strides = array<i32>} : memref<8x32xf32, #tpu.memory_space<vmem>>, vector<8x8xf32>,
    %30 = vector.extract_strided_slice %11 {offsets = [0, 24], sizes = [8, 8], strides = [1, 1]} : vector<8x96xf32> to vector<8x8xf32>
    %cst_16 = arith.constant 0.353553385 : f32
    %31 = vector.broadcast %cst_16 : f32 to vector<8x8xf32>
    %32 = arith.mulf %30, %31 : vector<8x8xf32>
    %33 = vector.extract_strided_slice %11 {offsets = [0, 32], sizes = [8, 8], strides = [1, 1]} : vector<8x96xf32> to vector<8x8xf32>
    %34 = vector.extract_strided_slice %11 {offsets = [0, 40], sizes = [8, 8], strides = [1, 1]} : vector<8x96xf32> to vector<8x8xf32>
    %cst_17 = arith.constant dense<0.000000e+00> : vector<8x8xf32>
    %35 = tpu.matmul %32, %33, %cst_17 {dimension_numbers = #tpu.dot_dimension_numbers<[1], [1], [0], [0], [0, 0, 1, 0], [], []>} : vector<8x8xf32>, vector<8x8xf32>, vector<8x8xf32> -> vector<8x8xf32>
    %cst_18 = arith.constant dense<0xFF800000> : vector<8xf32>
    %36 = vector.multi_reduction <maximumf>, %35, %cst_18 [1] : vector<8x8xf32> to vector<8xf32>
    %37 = vector.shape_cast %36 : vector<8xf32> to vector<8x1xf32>
    %38 = vector.broadcast %37 : vector<8x1xf32> to vector<8x8xf32>
    %39 = arith.subf %35, %38 : vector<8x8xf32>
    %40 = math.exp %39 : vector<8x8xf32>
    %cst_19 = arith.constant dense<0.000000e+00> : vector<8xf32>
    %41 = vector.multi_reduction <add>, %40, %cst_19 [1] : vector<8x8xf32> to vector<8xf32>
    %42 = vector.shape_cast %41 : vector<8xf32> to vector<8x1xf32>
    %43 = tpu.reciprocal %42 {approx = true} : vector<8x1xf32> -> vector<8x1xf32>
    %44 = vector.broadcast %43 : vector<8x1xf32> to vector<8x8xf32>
    %45 = arith.mulf %40, %44 : vector<8x8xf32>
    %cst_20 = arith.constant dense<0.000000e+00> : vector<8x8xf32>
    %46 = tpu.matmul %45, %34, %cst_20 {dimension_numbers = #tpu.dot_dimension_numbers<[1], [0], [0], [1], [0, 0, 1, 1], [], []>} : vector<8x8xf32>, vector<8x8xf32>, vector<8x8xf32> -> vector<8x8xf32>
    %c0_21 = arith.constant 0 : index
    %c8 = arith.constant 8 : index
    %47 = vector.load %arg9[%c0_21, %c8] : memref<8x32xf32, #tpu.memory_space<vmem>>, vector<8x8xf32>
    tpu.vector_store %arg9[%c0_21, %c8], %46 {strides = array<i32>} : memref<8x32xf32, #tpu.memory_space<vmem>>, vector<8x8xf32>,
    %48 = vector.extract_strided_slice %11 {offsets = [0, 48], sizes = [8, 8], strides = [1, 1]} : vector<8x96xf32> to vector<8x8xf32>
    %cst_22 = arith.constant 0.353553385 : f32
    %49 = vector.broadcast %cst_22 : f32 to vector<8x8xf32>
    %50 = arith.mulf %48, %49 : vector<8x8xf32>
    %51 = vector.extract_strided_slice %11 {offsets = [0, 56], sizes = [8, 8], strides = [1, 1]} : vector<8x96xf32> to vector<8x8xf32>
    %52 = vector.extract_strided_slice %11 {offsets = [0, 64], sizes = [8, 8], strides = [1, 1]} : vector<8x96xf32> to vector<8x8xf32>
    %cst_23 = arith.constant dense<0.000000e+00> : vector<8x8xf32>
    %53 = tpu.matmul %50, %51, %cst_23 {dimension_numbers = #tpu.dot_dimension_numbers<[1], [1], [0], [0], [0, 0, 1, 0], [], []>} : vector<8x8xf32>, vector<8x8xf32>, vector<8x8xf32> -> vector<8x8xf32>
    %cst_24 = arith.constant dense<0xFF800000> : vector<8xf32>
    %54 = vector.multi_reduction <maximumf>, %53, %cst_24 [1] : vector<8x8xf32> to vector<8xf32>
    %55 = vector.shape_cast %54 : vector<8xf32> to vector<8x1xf32>
    %56 = vector.broadcast %55 : vector<8x1xf32> to vector<8x8xf32>
    %57 = arith.subf %53, %56 : vector<8x8xf32>
    %58 = math.exp %57 : vector<8x8xf32>
    %cst_25 = arith.constant dense<0.000000e+00> : vector<8xf32>
    %59 = vector.multi_reduction <add>, %58, %cst_25 [1] : vector<8x8xf32> to vector<8xf32>
    %60 = vector.shape_cast %59 : vector<8xf32> to vector<8x1xf32>
    %61 = tpu.reciprocal %60 {approx = true} : vector<8x1xf32> -> vector<8x1xf32>
    %62 = vector.broadcast %61 : vector<8x1xf32> to vector<8x8xf32>
    %63 = arith.mulf %58, %62 : vector<8x8xf32>
    %cst_26 = arith.constant dense<0.000000e+00> : vector<8x8xf32>
    %64 = tpu.matmul %63, %52, %cst_26 {dimension_numbers = #tpu.dot_dimension_numbers<[1], [0], [0], [1], [0, 0, 1, 1], [], []>} : vector<8x8xf32>, vector<8x8xf32>, vector<8x8xf32> -> vector<8x8xf32>
    %c0_27 = arith.constant 0 : index
    %c16 = arith.constant 16 : index
    %65 = vector.load %arg9[%c0_27, %c16] : memref<8x32xf32, #tpu.memory_space<vmem>>, vector<8x8xf32>
    tpu.vector_store %arg9[%c0_27, %c16], %64 {strides = array<i32>} : memref<8x32xf32, #tpu.memory_space<vmem>>, vector<8x8xf32>,
    %66 = vector.extract_strided_slice %11 {offsets = [0, 72], sizes = [8, 8], strides = [1, 1]} : vector<8x96xf32> to vector<8x8xf32>
    %cst_28 = arith.constant 0.353553385 : f32
    %67 = vector.broadcast %cst_28 : f32 to vector<8x8xf32>
    %68 = arith.mulf %66, %67 : vector<8x8xf32>
    %69 = vector.extract_strided_slice %11 {offsets = [0, 80], sizes = [8, 8], strides = [1, 1]} : vector<8x96xf32> to vector<8x8xf32>
    %70 = vector.extract_strided_slice %11 {offsets = [0, 88], sizes = [8, 8], strides = [1, 1]} : vector<8x96xf32> to vector<8x8xf32>
    %cst_29 = arith.constant dense<0.000000e+00> : vector<8x8xf32>
    %71 = tpu.matmul %68, %69, %cst_29 {dimension_numbers = #tpu.dot_dimension_numbers<[1], [1], [0], [0], [0, 0, 1, 0], [], []>} : vector<8x8xf32>, vector<8x8xf32>, vector<8x8xf32> -> vector<8x8xf32>
    %cst_30 = arith.constant dense<0xFF800000> : vector<8xf32>
    %72 = vector.multi_reduction <maximumf>, %71, %cst_30 [1] : vector<8x8xf32> to vector<8xf32>
    %73 = vector.shape_cast %72 : vector<8xf32> to vector<8x1xf32>
    %74 = vector.broadcast %73 : vector<8x1xf32> to vector<8x8xf32>
    %75 = arith.subf %71, %74 : vector<8x8xf32>
    %76 = math.exp %75 : vector<8x8xf32>
    %cst_31 = arith.constant dense<0.000000e+00> : vector<8xf32>
    %77 = vector.multi_reduction <add>, %76, %cst_31 [1] : vector<8x8xf32> to vector<8xf32>
    %78 = vector.shape_cast %77 : vector<8xf32> to vector<8x1xf32>
    %79 = tpu.reciprocal %78 {approx = true} : vector<8x1xf32> -> vector<8x1xf32>
    %80 = vector.broadcast %79 : vector<8x1xf32> to vector<8x8xf32>
    %81 = arith.mulf %76, %80 : vector<8x8xf32>
    %cst_32 = arith.constant dense<0.000000e+00> : vector<8x8xf32>
    %82 = tpu.matmul %81, %70, %cst_32 {dimension_numbers = #tpu.dot_dimension_numbers<[1], [0], [0], [1], [0, 0, 1, 1], [], []>} : vector<8x8xf32>, vector<8x8xf32>, vector<8x8xf32> -> vector<8x8xf32>
    %c0_33 = arith.constant 0 : index
    %c24 = arith.constant 24 : index
    %83 = vector.load %arg9[%c0_33, %c24] : memref<8x32xf32, #tpu.memory_space<vmem>>, vector<8x8xf32>
    tpu.vector_store %arg9[%c0_33, %c24], %82 {strides = array<i32>} : memref<8x32xf32, #tpu.memory_space<vmem>>, vector<8x8xf32>,
    %c0_34 = arith.constant 0 : index
    %c0_35 = arith.constant 0 : index
    %84 = vector.load %arg8[%c0_34, %c0_35] : memref<8x32xf32, #tpu.memory_space<vmem>>, vector<8x32xf32>
    %c0_36 = arith.constant 0 : index
    %c0_37 = arith.constant 0 : index
    %85 = vector.load %arg9[%c0_36, %c0_37] : memref<8x32xf32, #tpu.memory_space<vmem>>, vector<8x32xf32>
    %c0_38 = arith.constant 0 : index
    %c0_39 = arith.constant 0 : index
    %c0_40 = arith.constant 0 : index
    %86 = vector.load %arg5[%c0_38, %c0_39, %c0_40] : memref<1x32x32xf32, #tpu.memory_space<vmem>>, vector<1x32x32xf32>
    %87 = vector.shape_cast %86 : vector<1x32x32xf32> to vector<32x32xf32>
    %cst_41 = arith.constant dense<0.000000e+00> : vector<8x32xf32>
    %88 = tpu.matmul %85, %87, %cst_41 {dimension_numbers = #tpu.dot_dimension_numbers<[1], [0], [0], [1], [0, 0, 1, 1], [], []>} : vector<8x32xf32>, vector<32x32xf32>, vector<8x32xf32> -> vector<8x32xf32>
    %89 = arith.addf %84, %88 : vector<8x32xf32>
    %c0_42 = arith.constant 0 : index
    %c0_43 = arith.constant 0 : index
    %90 = vector.load %arg8[%c0_42, %c0_43] : memref<8x32xf32, #tpu.memory_space<vmem>>, vector<8x32xf32>
    tpu.vector_store %arg8[%c0_42, %c0_43], %89 {strides = array<i32>} : memref<8x32xf32, #tpu.memory_space<vmem>>, vector<8x32xf32>,
    %c0_i32_44 = arith.constant 0 : i32
    %91 = arith.cmpi eq, %arg1, %c0_i32_44 : i32
    %92 = arith.extui %91 : i1 to i32
    %c0_i32_45 = arith.constant 0 : i32
    %93 = arith.cmpi ne, %92, %c0_i32_45 : i32
    scf.if %93 {
      %c0_46 = arith.constant 0 : index
      %c0_47 = arith.constant 0 : index
      %94 = vector.load %arg8[%c0_46, %c0_47] : memref<8x32xf32, #tpu.memory_space<vmem>>, vector<8x32xf32>
      %c0_48 = arith.constant 0 : index
      %c0_49 = arith.constant 0 : index
      %95 = vector.load %arg6[%c0_48, %c0_49] : memref<1x32xf32, #tpu.memory_space<vmem>>, vector<1x32xf32>
      %96 = vector.broadcast %95 : vector<1x32xf32> to vector<8x32xf32>
      %97 = arith.addf %94, %96 : vector<8x32xf32>
      %c0_50 = arith.constant 0 : index
      %c0_51 = arith.constant 0 : index
      %c0_52 = arith.constant 0 : index
      %98 = vector.load %arg7[%c0_50, %c0_51, %c0_52] : memref<1x8x32xf32, #tpu.memory_space<vmem>>, vector<1x8x32xf32>
      %99 = vector.shape_cast %98 : vector<1x8x32xf32> to vector<8x32xf32>
      %100 = vector.shape_cast %97 : vector<8x32xf32> to vector<1x8x32xf32>
      tpu.vector_store %arg7[%c0_50, %c0_51, %c0_52], %100 {strides = array<i32>} : memref<1x8x32xf32, #tpu.memory_space<vmem>>, vector<1x8x32xf32>,
    } else {
    }
    return
  }
  func.func @transform_0(%arg0: i32, %arg1: i32) -> (i32, i32, i32) {
    %c0_i32 = arith.constant 0 : i32
    %c0_i32_0 = arith.constant 0 : i32
    %c0_i32_1 = arith.constant 0 : i32
    return %arg0, %c0_i32, %c0_i32_0 : i32, i32, i32
  }
  func.func @transform_1(%arg0: i32, %arg1: i32) -> (i32, i32, i32) {
    %c0_i32 = arith.constant 0 : i32
    %c0_i32_0 = arith.constant 0 : i32
    %c0_i32_1 = arith.constant 0 : i32
    return %arg1, %c0_i32, %c0_i32_0 : i32, i32, i32
  }
  func.func @transform_2(%arg0: i32, %arg1: i32) -> (i32, i32, i32) {
    %c0_i32 = arith.constant 0 : i32
    %c0_i32_0 = arith.constant 0 : i32
    %c0_i32_1 = arith.constant 0 : i32
    return %arg1, %c0_i32, %c0_i32_0 : i32, i32, i32
  }
  func.func @transform_3(%arg0: i32, %arg1: i32) -> (i32, i32, i32) {
    %c0_i32 = arith.constant 0 : i32
    %c0_i32_0 = arith.constant 0 : i32
    %c0_i32_1 = arith.constant 0 : i32
    return %arg1, %c0_i32, %c0_i32_0 : i32, i32, i32
  }
  func.func @transform_4(%arg0: i32, %arg1: i32) -> (i32, i32) {
    %c0_i32 = arith.constant 0 : i32
    %c0_i32_0 = arith.constant 0 : i32
    %c0_i32_1 = arith.constant 0 : i32
    return %c0_i32, %c0_i32_0 : i32, i32
  }
  func.func @transform_5(%arg0: i32, %arg1: i32) -> (i32, i32, i32) {
    %c0_i32 = arith.constant 0 : i32
    %c0_i32_0 = arith.constant 0 : i32
    %c0_i32_1 = arith.constant 0 : i32
    return %arg0, %c0_i32, %c0_i32_0 : i32, i32, i32
  }
}

</mosaic_0001>

<llo_original>
// kernel: tpu_custom_call.1
$region0: #{tpu_custom_call.1}
  #allocation0 [shape = 'u32[]', space=smem, size = 0x4, offset = 0x4, fixed_abs, tag = 'smem constant byte address 0x4 - core index']
  #allocation1 [shape = 'u32[144,128]{1,0:T(1,128)}', space=vmem, size = 0x12000, scoped, tag = 'internal scratch']
  #allocation2 [shape = 'f32[8,32]{1,0:T(8,128)}', space=vmem, size = 0x1000, scoped, tag = 'scratch operand']
  #allocation3 [shape = 'f32[8,32]{1,0:T(8,128)}', space=vmem, size = 0x1000, scoped, tag = 'scratch operand']
  #allocation4 [shape = 'f32[8,8]{1,0:T(8,128)}', space=vmem, size = 0x1000, scoped, tag = 'scratch operand']
  %s0 = inlined_call_operand.hbm [shape: f32[2,8,32], index: 0, kind: input, shape index: {}]
  %s1 = inlined_call_operand.hbm [shape: f32[1,32,96], index: 1, kind: input, shape index: {}]
  %s2 = inlined_call_operand.vmem [shape: f32[1,1,96], index: 2, kind: input, shape index: {}]
  %s3 = inlined_call_operand.hbm [shape: f32[1,32,32], index: 3, kind: input, shape index: {}]
  %s4 = inlined_call_operand.vmem [shape: f32[1,32], index: 4, kind: input, shape index: {}]
  %s5 = inlined_call_operand.hbm [shape: f32[2,8,32], index: 5, kind: output, shape index: {}]
  %s6 = sld [smem:[#allocation0]]
  $region73: #{tpu_custom_call.1} parent=0
    _
  %s8 = ssub.s32 1, %s6
  %s9 = scalar_select 0, %s8, %s6
  $region1: #{tpu_custom_call.1} parent=0
    #allocation5 [shape = 'u8[8192]{0}', space=vmem, size = 0x2000, scoped, tag = 'input window, operand 0']
    #allocation6 [shape = 's32[2]{0}', space=sflag, size = 0x8, scoped, tag = 'scoped memory for tpu_custom_call.1']
    #allocation7 [shape = 's32[2]{0}', space=sflag, size = 0x8, scoped, tag = 'scoped memory for tpu_custom_call.1']
    #allocation8 [shape = 'u8[16384]{0}', space=vmem, size = 0x4000, scoped, tag = 'input window, operand 1, single buffered']
    #allocation9 [shape = 's32[1]{0}', space=sflag, size = 0x4, scoped, tag = 'scoped memory for tpu_custom_call.1']
    #allocation10 [shape = 'u8[16384]{0}', space=vmem, size = 0x4000, scoped, tag = 'input window, operand 3, single buffered']
    #allocation11 [shape = 'u8[8192]{0}', space=vmem, size = 0x2000, scoped, tag = 'output window, operand 0']
    %10 = vsyncpa [#allocation6], 0
    %s11 = scalar_lea.sflag [#allocation6], 1
    %12 = vsyncpa %s11, 0
    %13 = vsyncpa [#allocation9], 0
    %14 = vsyncpa [#allocation7], 0
    %s15 = scalar_lea.sflag [#allocation7], 1
    %16 = vsyncpa %s15, 0
    loop: start=0, step=1, limit=4
    $region2: #{tpu_custom_call.1} parent=1 // loop_pre_header
      _
    $region3: #{tpu_custom_call.1} parent=1 // loop_header
      %s18 = sphi 0, %s22
      %p19 = scmp.ge.s32.totalorder %s18, 4
      %s25 = sphi 0, %s37
      %s26 = sphi 0, %s33
      %s27 = sphi 0, %s25
      %s28 = sphi 0, %s26
      %s29 = sphi 0, %s27
      %s30 = sphi 0, %s28
      %s40 = sphi 0, %s42
      %s43 = sphi 0, %s40
      %s44 = sphi 0, %s43
      %s60 = sphi 0, %s44
      %s66 = sphi 0, %s68
      %s69 = sphi 0, %s66
      %s70 = sphi 0, %s69
      %s86 = sphi 0, %s70
      %s92 = sphi 0, %s94
      %s95 = sphi 0, %s92
      %s96 = sphi 0, %s95
      %s112 = sphi 0, %s96
      %s118 = sphi 0, %s120
      %s121 = sphi 0, %s118
      %s122 = sphi 0, %s121
      %s138 = sphi 0, %s122
      %s142 = sphi 0, %s142
      %s144 = sphi 0, %s142
      %s145 = sphi 0, %s144
      %s159 = sphi 0, %s145
      %s165 = sphi 0, %s167
      %s168 = sphi 0, %s165
      %s169 = sphi 0, %s168
      %s185 = sphi 0, %s169
    $region4: #{tpu_custom_call.1} parent=1 // loop_header_branch
      %21 = sbr.rel (%p19) target = $region8
    $region5: #{tpu_custom_call.1} parent=1 // loop_body
      %s23 = ssub.s32 %s18, 1
      %s24 = ssub.s32 %s18, 2
      %s31 = sadd.s32 1, %s26
      %p32 = scmp.ge.s32.totalorder %s31, 1
      %s33 = scalar_select %p32, 0, %s31
      %s34 = sadd.s32 1, %s25
      %s35 = scalar_select %p32, %s34, %s25
      %p36 = scmp.ge.s32.totalorder %s35, 2
      %s37 = scalar_select %p36, 0, %s35
      %s38 = ssub.s32 %s25, %s37
      %p39 = scmp.eq.s32.totalorder %s38, 0
      %s41 = sadd.s32 %s40, 1
      %s42 = scalar_select %p39, %s40, %s41
      %p45 = pneg %p39
      %p46 = scmp.eq.s32.totalorder %s18, 1
      %p47 = por %p45, %p46
      %p48 = scmp.ne.s32.totalorder %s40, %s43
      %p49 = scmp.eq.s32.totalorder %s18, 0
      %p50 = por %p48, %p49
      %p51 = scmp.ne.s32.totalorder %s40, %s43
      %p52 = scmp.eq.s32.totalorder %s23, 1
      %p53 = por %p51, %p52
      %p54 = scmp.ne.s32.totalorder %s43, %s44
      %p55 = scmp.eq.s32.totalorder %s23, 0
      %p56 = por %p54, %p55
      %p57 = scmp.ne.s32.totalorder %s43, %s44
      %p58 = scmp.eq.s32.totalorder %s24, 1
      %p59 = por %p57, %p58
      %p61 = scmp.ne.s32.totalorder %s44, %s60
      %p62 = scmp.eq.s32.totalorder %s24, 0
      %p63 = por %p61, %p62
      %s64 = ssub.s32 %s26, %s33
      %p65 = scmp.eq.s32.totalorder %s64, 0
      %s67 = sadd.s32 %s66, 1
      %s68 = scalar_select %p65, %s66, %s67
      %p71 = pneg %p65
      %p72 = scmp.eq.s32.totalorder %s18, 1
      %p73 = por %p71, %p72
      %p74 = scmp.ne.s32.totalorder %s66, %s69
      %p75 = scmp.eq.s32.totalorder %s18, 0
      %p76 = por %p74, %p75
      %p77 = scmp.ne.s32.totalorder %s66, %s69
      %p78 = scmp.eq.s32.totalorder %s23, 1
      %p79 = por %p77, %p78
      %p80 = scmp.ne.s32.totalorder %s69, %s70
      %p81 = scmp.eq.s32.totalorder %s23, 0
      %p82 = por %p80, %p81
      %p83 = scmp.ne.s32.totalorder %s69, %s70
      %p84 = scmp.eq.s32.totalorder %s24, 1
      %p85 = por %p83, %p84
      %p87 = scmp.ne.s32.totalorder %s70, %s86
      %p88 = scmp.eq.s32.totalorder %s24, 0
      %p89 = por %p87, %p88
      %s90 = ssub.s32 %s26, %s33
      %p91 = scmp.eq.s32.totalorder %s90, 0
      %s93 = sadd.s32 %s92, 1
      %s94 = scalar_select %p91, %s92, %s93
      %p97 = pneg %p91
      %p98 = scmp.eq.s32.totalorder %s18, 1
      %p99 = por %p97, %p98
      %p100 = scmp.ne.s32.totalorder %s92, %s95
      %p101 = scmp.eq.s32.totalorder %s18, 0
      %p102 = por %p100, %p101
      %p103 = scmp.ne.s32.totalorder %s92, %s95
      %p104 = scmp.eq.s32.totalorder %s23, 1
      %p105 = por %p103, %p104
      %p106 = scmp.ne.s32.totalorder %s95, %s96
      %p107 = scmp.eq.s32.totalorder %s23, 0
      %p108 = por %p106, %p107
      %p109 = scmp.ne.s32.totalorder %s95, %s96
      %p110 = scmp.eq.s32.totalorder %s24, 1
      %p111 = por %p109, %p110
      %p113 = scmp.ne.s32.totalorder %s96, %s112
      %p114 = scmp.eq.s32.totalorder %s24, 0
      %p115 = por %p113, %p114
      %s116 = ssub.s32 %s26, %s33
      %p117 = scmp.eq.s32.totalorder %s116, 0
      %s119 = sadd.s32 %s118, 1
      %s120 = scalar_select %p117, %s118, %s119
      %p123 = pneg %p117
      %p124 = scmp.eq.s32.totalorder %s18, 1
      %p125 = por %p123, %p124
      %p126 = scmp.ne.s32.totalorder %s118, %s121
      %p127 = scmp.eq.s32.totalorder %s18, 0
      %p128 = por %p126, %p127
      %p129 = scmp.ne.s32.totalorder %s118, %s121
      %p130 = scmp.eq.s32.totalorder %s23, 1
      %p131 = por %p129, %p130
      %p132 = scmp.ne.s32.totalorder %s121, %s122
      %p133 = scmp.eq.s32.totalorder %s23, 0
      %p134 = por %p132, %p133
      %p135 = scmp.ne.s32.totalorder %s121, %s122
      %p136 = scmp.eq.s32.totalorder %s24, 1
      %p137 = por %p135, %p136
      %p139 = scmp.ne.s32.totalorder %s122, %s138
      %p140 = scmp.eq.s32.totalorder %s24, 0
      %p141 = por %p139, %p140
      %s143 = sadd.s32 %s142, 1
      %p146 = scmp.eq.s32.totalorder %s18, 1
      %p147 = scmp.ne.s32.totalorder %s142, %s144
      %p148 = scmp.eq.s32.totalorder %s18, 0
      %p149 = por %p147, %p148
      %p150 = scmp.ne.s32.totalorder %s142, %s144
      %p151 = scmp.eq.s32.totalorder %s23, 1
      %p152 = por %p150, %p151
      %p153 = scmp.ne.s32.totalorder %s144, %s145
      %p154 = scmp.eq.s32.totalorder %s23, 0
      %p155 = por %p153, %p154
      %p156 = scmp.ne.s32.totalorder %s144, %s145
      %p157 = scmp.eq.s32.totalorder %s24, 1
      %p158 = por %p156, %p157
      %p160 = scmp.ne.s32.totalorder %s145, %s159
      %p161 = scmp.eq.s32.totalorder %s24, 0
      %p162 = por %p160, %p161
      %s163 = ssub.s32 %s25, %s37
      %p164 = scmp.eq.s32.totalorder %s163, 0
      %s166 = sadd.s32 %s165, 1
      %s167 = scalar_select %p164, %s165, %s166
      %p170 = pneg %p164
      %p171 = scmp.eq.s32.totalorder %s18, 1
      %p172 = por %p170, %p171
      %p173 = scmp.ne.s32.totalorder %s165, %s168
      %p174 = scmp.eq.s32.totalorder %s18, 0
      %p175 = por %p173, %p174
      %p176 = scmp.ne.s32.totalorder %s165, %s168
      %p177 = scmp.eq.s32.totalorder %s23, 1
      %p178 = por %p176, %p177
      %p179 = scmp.ne.s32.totalorder %s168, %s169
      %p180 = scmp.eq.s32.totalorder %s23, 0
      %p181 = por %p179, %p180
      %p182 = scmp.ne.s32.totalorder %s168, %s169
      %p183 = scmp.eq.s32.totalorder %s24, 1
      %p184 = por %p182, %p183
      %p186 = scmp.ne.s32.totalorder %s169, %s185
      %p187 = scmp.eq.s32.totalorder %s24, 0
      %p188 = por %p186, %p187
      %p189 = scmp.le.s32.totalorder 1, %s18
      %p190 = scmp.lt.s32.totalorder %s18, 3
      %p191 = pnand %p189, %p190
      %p192 = pneg %p191
      // Predicated region
      $region9: #{tpu_custom_call.1} parent=5 // pred_check
        _
      $region10: #{tpu_custom_call.1} parent=5 // pred_check_branch
        %194 = sbr.rel (%p191) target = $region12
      $region11: #{tpu_custom_call.1} parent=5 // pred_region
        %s195 = ssub.s32 %s18, 1
        // Predicated region
        $region13: #{tpu_custom_call.1} parent=11 // pred_check
          %p196 = pneg %p82
        $region14: #{tpu_custom_call.1} parent=11 // pred_check_branch
          %198 = sbr.rel (%p196) target = $region16
        $region15: #{tpu_custom_call.1} parent=11 // pred_region
          %s200 = ssub.s32 512, 512
          %201 = vsyncadd [#allocation9], %s200
          %s202 = smul.addr %s28, 4
          %s203 = smul.addr %s202, 128
          %s204 = scalar_lea.hbm %s1, %s203
          %s205 = sshll.u32 [#allocation8], 4
          %s206 = int_to_ptr.vmem [resolvable:$true] %s205
          %211 = dma.hbm_to_vmem [thread:$0]  %s204, 512, %s206, [#allocation9], 128, 128, 8
        $region16: #{tpu_custom_call.1} parent=11 // pred_fallthru
          _
        // Predicated region
        $region17: #{tpu_custom_call.1} parent=11 // pred_check
          %p212 = pneg %p108
        $region18: #{tpu_custom_call.1} parent=11 // pred_check_branch
          %214 = sbr.rel (%p212) target = $region20
        $region19: #{tpu_custom_call.1} parent=11 // pred_region
          %p215 = scmp.lt.s32.totalorder %s28, 0
          %s216 = scalar_select %p215, %s28, 0
          %s217 = scalar_lea.vmem %s2, %s216
        $region20: #{tpu_custom_call.1} parent=11 // pred_fallthru
          _
        // Predicated region
        $region21: #{tpu_custom_call.1} parent=11 // pred_check
          %p218 = pneg %p134
        $region22: #{tpu_custom_call.1} parent=11 // pred_check_branch
          %220 = sbr.rel (%p218) target = $region24
        $region23: #{tpu_custom_call.1} parent=11 // pred_region
          %s222 = ssub.s32 512, 512
          %223 = vsyncadd [#allocation9], %s222
          %s224 = smul.addr %s28, 4
          %s225 = smul.addr %s224, 128
          %s226 = scalar_lea.hbm %s3, %s225
          %s227 = sshll.u32 [#allocation10], 4
          %s228 = int_to_ptr.vmem [resolvable:$true] %s227
          %233 = dma.hbm_to_vmem [thread:$0]  %s226, 512, %s228, [#allocation9], 128, 128, 8
        $region24: #{tpu_custom_call.1} parent=11 // pred_fallthru
          _
        // Predicated region
        $region25: #{tpu_custom_call.1} parent=11 // pred_check
          %p234 = pneg %p155
        $region26: #{tpu_custom_call.1} parent=11 // pred_check_branch
          %236 = sbr.rel (%p234) target = $region28
        $region27: #{tpu_custom_call.1} parent=11 // pred_region
          _
        $region28: #{tpu_custom_call.1} parent=11 // pred_fallthru
          _
      $region12: #{tpu_custom_call.1} parent=5 // pred_fallthru
        _
      %p237 = scmp.lt.s32.totalorder %s18, 2
      // Predicated region
      $region29: #{tpu_custom_call.1} parent=5 // pred_check
        %p238 = pneg %p237
      $region30: #{tpu_custom_call.1} parent=5 // pred_check_branch
        %240 = sbr.rel (%p238) target = $region32
      $region31: #{tpu_custom_call.1} parent=5 // pred_region
        // Predicated region
        $region33: #{tpu_custom_call.1} parent=31 // pred_check
          %p241 = pneg %p50
        $region34: #{tpu_custom_call.1} parent=31 // pred_check_branch
          %243 = sbr.rel (%p241) target = $region36
        $region35: #{tpu_custom_call.1} parent=31 // pred_region
          %s244 = sand.u32 %s40, 1
          %s245 = scalar_lea.sflag [#allocation6], %s244
          %s246 = sand.u32 %s40, 1
          %s247 = smul.addr %s246, 8
          %s248 = scalar_lea.vmem [#allocation5], %s247
          %s250 = ssub.s32 128, 128
          %251 = vsyncadd %s245, %s250
          %s252 = smul.addr %s25, 128
          %s253 = scalar_lea.hbm %s0, %s252
          %s255 = sshll.u32 %s248, 4
          %s256 = int_to_ptr.vmem [resolvable:$true] %s255
          %258 = dma.hbm_to_vmem [thread:$0]  %s253, 128, %s256, %s245
        $region36: #{tpu_custom_call.1} parent=31 // pred_fallthru
          _
      $region32: #{tpu_custom_call.1} parent=5 // pred_fallthru
        _
      %p259 = scmp.le.s32.totalorder 1, %s18
      %p260 = scmp.lt.s32.totalorder %s18, 3
      %p261 = pnand %p259, %p260
      %p262 = pneg %p261
      // Predicated region
      $region37: #{tpu_custom_call.1} parent=5 // pred_check
        _
      $region38: #{tpu_custom_call.1} parent=5 // pred_check_branch
        %264 = sbr.rel (%p261) target = $region40
      $region39: #{tpu_custom_call.1} parent=5 // pred_region
        %s265 = ssub.s32 %s18, 1
        %s266 = sand.u32 %s43, 1
        %s267 = scalar_lea.sflag [#allocation6], %s266
        %s268 = sand.u32 %s43, 1
        %s269 = smul.addr %s268, 8
        %s270 = scalar_lea.vmem [#allocation5], %s269
        // Predicated region
        $region41: #{tpu_custom_call.1} parent=39 // pred_check
          %p271 = pneg %p56
        $region42: #{tpu_custom_call.1} parent=39 // pred_check_branch
          %273 = sbr.rel (%p271) target = $region44
        $region43: #{tpu_custom_call.1} parent=39 // pred_region
          %274 = dma.done %s267, 128
        $region44: #{tpu_custom_call.1} parent=39 // pred_fallthru
          _
        // Predicated region
        $region45: #{tpu_custom_call.1} parent=39 // pred_check
          %p275 = pneg %p82
        $region46: #{tpu_custom_call.1} parent=39 // pred_check_branch
          %277 = sbr.rel (%p275) target = $region48
        $region47: #{tpu_custom_call.1} parent=39 // pred_region
          %278 = dma.done [#allocation9], 512
        $region48: #{tpu_custom_call.1} parent=39 // pred_fallthru
          _
        // Predicated region
        $region49: #{tpu_custom_call.1} parent=39 // pred_check
          %p279 = pneg %p134
        $region50: #{tpu_custom_call.1} parent=39 // pred_check_branch
          %281 = sbr.rel (%p279) target = $region52
        $region51: #{tpu_custom_call.1} parent=39 // pred_region
          %282 = dma.done [#allocation9], 512
        $region52: #{tpu_custom_call.1} parent=39 // pred_fallthru
          _
        %s283 = sand.u32 %s43, 1
        %s284 = scalar_lea.sflag [#allocation6], %s283
        %s285 = sand.u32 %s43, 1
        %s286 = smul.addr %s285, 8
        %s287 = scalar_lea.vmem [#allocation5], %s286
        %p288 = pneg %p56
        %p289 = pneg %p53
        %p290 = pneg %p82
        %p291 = pneg %p79
        %p292 = scmp.lt.s32.totalorder %s28, 0
        %s293 = scalar_select %p292, %s28, 0
        %s294 = scalar_lea.vmem %s2, %s293
        %p295 = pneg %p108
        %p296 = pneg %p105
        %p297 = pneg %p134
        %p298 = pneg %p131
        %p299 = pneg %p155
        %p300 = pneg %p152
        %p301 = pneg %p181
        %p302 = pneg %p178
        %s303 = sand.u32 %s168, 1
        %s304 = scalar_lea.sflag [#allocation7], %s303
        %s305 = sand.u32 %s168, 1
        %s306 = smul.addr %s305, 8
        %s307 = scalar_lea.vmem [#allocation11], %s306
        %p308 = scmp.lt.s32.totalorder %s28, 0
        %s309 = scalar_select %p308, %s28, 0
        %s310 = scalar_lea.vmem %s2, %s309
        %p311 = scmp.eq.s32.totalorder %s28, 0
        // Predicated region
        $region53: #{tpu_custom_call.1} parent=39 // pred_check
          %p312 = pneg %p311
        $region54: #{tpu_custom_call.1} parent=39 // pred_check_branch
          %314 = sbr.rel (%p312) target = $region56
        $region55: #{tpu_custom_call.1} parent=39 // pred_region
          %vm315 = vcmask 261120
          %316 = vst.msk [vmem:[#allocation2] sm:$0xff] %vm315, 0.0
        $region56: #{tpu_custom_call.1} parent=39 // pred_fallthru
          _
        %v317 = vld [vmem:[%s270] sm:$0xff]
        %v318 = vld [vmem:[#allocation8] sm:$0xff]
        %v319 = vld [vmem:[#allocation8 + $0x8] sm:$0xff]
        %v320 = vld [vmem:[#allocation8 + $0x10] sm:$0xff]
        %v321 = vld [vmem:[#allocation8 + $0x18] sm:$0xff]
        %v322 = vld [vmem:[%s310] sm:$0x1]
        %v324 = vlaneseq
        %v325 = vshrl.u32 %v324, 7
        %v326 = vsub.s32 0, %v325
        %v327 = vrot.slane %v322, %v326
        %vm329 = vcmask 261120
        %v331 = vsel %vm329, %v317, 0
        %333 = vmatprep.subr.mxu0 0.0
        %334 = vmatpush1.msra.mxu0 %v318
        %335 = vmatprep.subr.mxu0 0.0
        %336 = vmatpush1.msra.mxu0 %v319
        %337 = vmatprep.subr.mxu0 0.0
        %338 = vmatpush1.msra.mxu0 %v320
        %339 = vmatprep.subr.mxu0 0.0
        %340 = vmatpush1.msra.mxu0 %v321
        %341 = vmatprep.subr.mxu0 0.0
        %342 = vmatpush1.msra.mxu0 0.0
        %343 = vmatprep.subr.mxu0 0.0
        %344 = vmatpush1.msra.mxu0 0.0
        %345 = vmatprep.subr.mxu0 0.0
        %346 = vmatpush1.msra.mxu0 0.0
        %347 = vmatprep.subr.mxu0 0.0
        %348 = vmatpush1.msra.mxu0 0.0
        %349 = vmatprep.subr.mxu0 0.0
        %350 = vmatpush1.msra.mxu0 0.0
        %351 = vmatprep.subr.mxu0 0.0
        %352 = vmatpush1.msra.mxu0 0.0
        %353 = vmatprep.subr.mxu0 0.0
        %354 = vmatpush1.msra.mxu0 0.0
        %355 = vmatprep.subr.mxu0 0.0
        %356 = vmatpush1.msra.mxu0 0.0
        %357 = vmatprep.subr.mxu0 0.0
        %358 = vmatpush1.msra.mxu0 0.0
        %359 = vmatprep.subr.mxu0 0.0
        %360 = vmatpush1.msra.mxu0 0.0
        %361 = vmatprep.subr.mxu0 0.0
        %362 = vmatpush1.msra.mxu0 0.0
        %363 = vmatprep.subr.mxu0 0.0
        %364 = vmatpush1.msra.mxu0 0.0
        %365 = vmatprep.subr.mxu0 0.0
        %366 = vmatpush1.msra.mxu0 0.0
        %367 = vmatprep.subr.mxu0 0.0
        %368 = vmatpush1.msra.mxu0 0.0
        %369 = vmatprep.subr.mxu0 0.0
        %370 = vmatpush1.msra.mxu0 0.0
        %371 = vmatprep.subr.mxu0 0.0
        %372 = vmatpush1.msra.mxu0 0.0
        %373 = vmatprep.subr.mxu0 0.0
        %374 = vmatpush1.msra.mxu0 0.0
        %375 = vmatprep.subr.mxu0 0.0
        %376 = vmatpush1.msra.mxu0 0.0
        %377 = vmatprep.subr.mxu0 0.0
        %378 = vmatpush1.msra.mxu0 0.0
        %379 = vmatprep.subr.mxu0 0.0
        %380 = vmatpush1.msra.mxu0 0.0
        %381 = vmatprep.subr.mxu0 0.0
        %382 = vmatpush1.msra.mxu0 0.0
        %383 = vmatprep.subr.mxu0 0.0
        %384 = vmatpush1.msra.mxu0 0.0
        %385 = vmatprep.subr.mxu0 0.0
        %386 = vmatpush1.msra.mxu0 0.0
        %387 = vmatprep.subr.mxu0 0.0
        %388 = vmatpush1.msra.mxu0 0.0
        %389 = vmatprep.subr.mxu0 0.0
        %390 = vmatpush1.msra.mxu0 0.0
        %391 = vmatprep.subr.mxu0 0.0
        %392 = vmatpush1.msra.mxu0 0.0
        %393 = vmatprep.subr.mxu0 0.0
        %394 = vmatpush1.msra.mxu0 0.0
        %395 = vmatprep.subr.mxu0 0.0
        %396 = vmatpush1.msra.mxu0 0.0
        %397 = vmatprep.mubr.f32.mxu0 0.0
        %398 = vmatmul.mubr.f32.gmra.mrb[0].mxu0 %v331
        %v399 = vpop.f32.mrb[0].mxu0
        %v400 = vadd.f32 %v327, %v399
        %v401 = vpop.f32.mrb[0].mxu0
        %402 = vdwg.mxu0
        %v403 = vmul.f32 %v400, 0.35355338
        %405 = vrot.lane.b32.xlu0 %v400, 120
        %v406 = vpop.permute.xlu0 %405
        %vm407 = vcmask 64512
        %v409 = vsel %vm407, %v403, 0
        %v411 = vsel %vm407, %v406, 0
        %413 = vmatprep.subr.mxu0 0.0
        %414 = vmatpush1.xpose.msra.mxu0 %v411
        %415 = vmatprep.subr.mxu0 0.0
        %416 = vmatpush1.xpose.msra.mxu0 0.0
        %417 = vmatprep.subr.mxu0 0.0
        %418 = vmatpush1.xpose.msra.mxu0 0.0
        %419 = vmatprep.subr.mxu0 0.0
        %420 = vmatpush1.xpose.msra.mxu0 0.0
        %421 = vmatprep.subr.mxu0 0.0
        %422 = vmatpush1.xpose.msra.mxu0 0.0
        %423 = vmatprep.subr.mxu0 0.0
        %424 = vmatpush1.xpose.msra.mxu0 0.0
        %425 = vmatprep.subr.mxu0 0.0
        %426 = vmatpush1.xpose.msra.mxu0 0.0
        %427 = vmatprep.subr.mxu0 0.0
        %428 = vmatpush1.xpose.msra.mxu0 0.0
        %429 = vmatprep.subr.mxu0 0.0
        %430 = vmatpush1.xpose.msra.mxu0 0.0
        %431 = vmatprep.subr.mxu0 0.0
        %432 = vmatpush1.xpose.msra.mxu0 0.0
        %433 = vmatprep.subr.mxu0 0.0
        %434 = vmatpush1.xpose.msra.mxu0 0.0
        %435 = vmatprep.subr.mxu0 0.0
        %436 = vmatpush1.xpose.msra.mxu0 0.0
        %437 = vmatprep.subr.mxu0 0.0
        %438 = vmatpush1.xpose.msra.mxu0 0.0
        %439 = vmatprep.subr.mxu0 0.0
        %440 = vmatpush1.xpose.msra.mxu0 0.0
        %441 = vmatprep.subr.mxu0 0.0
        %442 = vmatpush1.xpose.msra.mxu0 0.0
        %443 = vmatprep.subr.mxu0 0.0
        %444 = vmatpush1.xpose.msra.mxu0 0.0
        %445 = vmatprep.subr.mxu0 0.0
        %446 = vmatpush1.xpose.msra.mxu0 0.0
        %447 = vmatprep.subr.mxu0 0.0
        %448 = vmatpush1.xpose.msra.mxu0 0.0
        %449 = vmatprep.subr.mxu0 0.0
        %450 = vmatpush1.xpose.msra.mxu0 0.0
        %451 = vmatprep.subr.mxu0 0.0
        %452 = vmatpush1.xpose.msra.mxu0 0.0
        %453 = vmatprep.subr.mxu0 0.0
        %454 = vmatpush1.xpose.msra.mxu0 0.0
        %455 = vmatprep.subr.mxu0 0.0
        %456 = vmatpush1.xpose.msra.mxu0 0.0
        %457 = vmatprep.subr.mxu0 0.0
        %458 = vmatpush1.xpose.msra.mxu0 0.0
        %459 = vmatprep.subr.mxu0 0.0
        %460 = vmatpush1.xpose.msra.mxu0 0.0
        %461 = vmatprep.subr.mxu0 0.0
        %462 = vmatpush1.xpose.msra.mxu0 0.0
        %463 = vmatprep.subr.mxu0 0.0
        %464 = vmatpush1.xpose.msra.mxu0 0.0
        %465 = vmatprep.subr.mxu0 0.0
        %466 = vmatpush1.xpose.msra.mxu0 0.0
        %467 = vmatprep.subr.mxu0 0.0
        %468 = vmatpush1.xpose.msra.mxu0 0.0
        %469 = vmatprep.subr.mxu0 0.0
        %470 = vmatpush1.xpose.msra.mxu0 0.0
        %471 = vmatprep.subr.mxu0 0.0
        %472 = vmatpush1.xpose.msra.mxu0 0.0
        %473 = vmatprep.subr.mxu0 0.0
        %474 = vmatpush1.xpose.msra.mxu0 0.0
        %475 = vmatprep.subr.mxu0 0.0
        %476 = vmatpush1.xpose.msra.mxu0 0.0
        %477 = vmatprep.mubr.f32.mxu0 0.0
        %478 = vmatmul.mubr.f32.gmra.mrb[0].mxu0 %v409
        %v479 = vpop.f32.mrb[0].mxu0
        %v480 = vadd.f32 0.0, %v479
        %v481 = vpop.f32.mrb[0].mxu0
        %482 = vdwg.mxu0
        %v483 = vsel %vm407, %v480, -inf
        %484 = vmax.xlane.f32.xlu0 %v483
        %v485 = vpop.xlane.xlu0 %484
        %v486 = vsub.f32 %v480, %v485
        %v487 = vmul.f32 %v486, 1.442695
        %v488 = vpow.pop %v487
        %v489 = vsel %vm407, %v488, 0.0
        %490 = vadd.xlane.f32.xlu0 %v489
        %v491 = vpop.xlane.xlu0 %490
        %v492 = vrcp.pop %v491
        %v493 = vmul.f32 %v488, %v492
        %494 = vrot.lane.b32.xlu0 %v400, 112
        %v495 = vpop.permute.xlu0 %494
        %v498 = vsel %vm407, %v493, 0
        %500 = vmatprep.subr.mxu0 0.0
        %501 = vmatpush1.msra.mxu0 %v495
        %502 = vmatprep.subr.mxu0 0.0
        %503 = vmatpush1.msra.mxu0 0.0
        %504 = vmatprep.subr.mxu0 0.0
        %505 = vmatpush1.msra.mxu0 0.0
        %506 = vmatprep.subr.mxu0 0.0
        %507 = vmatpush1.msra.mxu0 0.0
        %508 = vmatprep.subr.mxu0 0.0
        %509 = vmatpush1.msra.mxu0 0.0
        %510 = vmatprep.subr.mxu0 0.0
        %511 = vmatpush1.msra.mxu0 0.0
        %512 = vmatprep.subr.mxu0 0.0
        %513 = vmatpush1.msra.mxu0 0.0
        %514 = vmatprep.subr.mxu0 0.0
        %515 = vmatpush1.msra.mxu0 0.0
        %516 = vmatprep.subr.mxu0 0.0
        %517 = vmatpush1.msra.mxu0 0.0
        %518 = vmatprep.subr.mxu0 0.0
        %519 = vmatpush1.msra.mxu0 0.0
        %520 = vmatprep.subr.mxu0 0.0
        %521 = vmatpush1.msra.mxu0 0.0
        %522 = vmatprep.subr.mxu0 0.0
        %523 = vmatpush1.msra.mxu0 0.0
        %524 = vmatprep.subr.mxu0 0.0
        %525 = vmatpush1.msra.mxu0 0.0
        %526 = vmatprep.subr.mxu0 0.0
        %527 = vmatpush1.msra.mxu0 0.0
        %528 = vmatprep.subr.mxu0 0.0
        %529 = vmatpush1.msra.mxu0 0.0
        %530 = vmatprep.subr.mxu0 0.0
        %531 = vmatpush1.msra.mxu0 0.0
        %532 = vmatprep.subr.mxu0 0.0
        %533 = vmatpush1.msra.mxu0 0.0
        %534 = vmatprep.subr.mxu0 0.0
        %535 = vmatpush1.msra.mxu0 0.0
        %536 = vmatprep.subr.mxu0 0.0
        %537 = vmatpush1.msra.mxu0 0.0
        %538 = vmatprep.subr.mxu0 0.0
        %539 = vmatpush1.msra.mxu0 0.0
        %540 = vmatprep.subr.mxu0 0.0
        %541 = vmatpush1.msra.mxu0 0.0
        %542 = vmatprep.subr.mxu0 0.0
        %543 = vmatpush1.msra.mxu0 0.0
        %544 = vmatprep.subr.mxu0 0.0
        %545 = vmatpush1.msra.mxu0 0.0
        %546 = vmatprep.subr.mxu0 0.0
        %547 = vmatpush1.msra.mxu0 0.0
        %548 = vmatprep.subr.mxu0 0.0
        %549 = vmatpush1.msra.mxu0 0.0
        %550 = vmatprep.subr.mxu0 0.0
        %551 = vmatpush1.msra.mxu0 0.0
        %552 = vmatprep.subr.mxu0 0.0
        %553 = vmatpush1.msra.mxu0 0.0
        %554 = vmatprep.subr.mxu0 0.0
        %555 = vmatpush1.msra.mxu0 0.0
        %556 = vmatprep.subr.mxu0 0.0
        %557 = vmatpush1.msra.mxu0 0.0
        %558 = vmatprep.subr.mxu0 0.0
        %559 = vmatpush1.msra.mxu0 0.0
        %560 = vmatprep.subr.mxu0 0.0
        %561 = vmatpush1.msra.mxu0 0.0
        %562 = vmatprep.subr.mxu0 0.0
        %563 = vmatpush1.msra.mxu0 0.0
        %564 = vmatprep.mubr.f32.mxu0 0.0
        %565 = vmatmul.mubr.f32.gmra.mrb[0].mxu0 %v498
        %v566 = vpop.f32.mrb[0].mxu0
        %v567 = vadd.f32 0.0, %v566
        %v568 = vpop.f32.mrb[0].mxu0
        %569 = vdwg.mxu0
        %570 = vst.msk [vmem:[#allocation3] sm:$0xff] %vm407, %v567
        %571 = vrot.lane.b32.xlu0 %v403, 104
        %v572 = vpop.permute.xlu0 %571
        %573 = vrot.lane.b32.xlu0 %v400, 96
        %v574 = vpop.permute.xlu0 %573
        %v575 = vsel %vm407, %v572, 0
        %v577 = vsel %vm407, %v574, 0
        %579 = vmatprep.subr.mxu0 0.0
        %580 = vmatpush1.xpose.msra.mxu0 %v577
        %581 = vmatprep.subr.mxu0 0.0
        %582 = vmatpush1.xpose.msra.mxu0 0.0
        %583 = vmatprep.subr.mxu0 0.0
        %584 = vmatpush1.xpose.msra.mxu0 0.0
        %585 = vmatprep.subr.mxu0 0.0
        %586 = vmatpush1.xpose.msra.mxu0 0.0
        %587 = vmatprep.subr.mxu0 0.0
        %588 = vmatpush1.xpose.msra.mxu0 0.0
        %589 = vmatprep.subr.mxu0 0.0
        %590 = vmatpush1.xpose.msra.mxu0 0.0
        %591 = vmatprep.subr.mxu0 0.0
        %592 = vmatpush1.xpose.msra.mxu0 0.0
        %593 = vmatprep.subr.mxu0 0.0
        %594 = vmatpush1.xpose.msra.mxu0 0.0
        %595 = vmatprep.subr.mxu0 0.0
        %596 = vmatpush1.xpose.msra.mxu0 0.0
        %597 = vmatprep.subr.mxu0 0.0
        %598 = vmatpush1.xpose.msra.mxu0 0.0
        %599 = vmatprep.subr.mxu0 0.0
        %600 = vmatpush1.xpose.msra.mxu0 0.0
        %601 = vmatprep.subr.mxu0 0.0
        %602 = vmatpush1.xpose.msra.mxu0 0.0
        %603 = vmatprep.subr.mxu0 0.0
        %604 = vmatpush1.xpose.msra.mxu0 0.0
        %605 = vmatprep.subr.mxu0 0.0
        %606 = vmatpush1.xpose.msra.mxu0 0.0
        %607 = vmatprep.subr.mxu0 0.0
        %608 = vmatpush1.xpose.msra.mxu0 0.0
        %609 = vmatprep.subr.mxu0 0.0
        %610 = vmatpush1.xpose.msra.mxu0 0.0
        %611 = vmatprep.subr.mxu0 0.0
        %612 = vmatpush1.xpose.msra.mxu0 0.0
        %613 = vmatprep.subr.mxu0 0.0
        %614 = vmatpush1.xpose.msra.mxu0 0.0
        %615 = vmatprep.subr.mxu0 0.0
        %616 = vmatpush1.xpose.msra.mxu0 0.0
        %617 = vmatprep.subr.mxu0 0.0
        %618 = vmatpush1.xpose.msra.mxu0 0.0
        %619 = vmatprep.subr.mxu0 0.0
        %620 = vmatpush1.xpose.msra.mxu0 0.0
        %621 = vmatprep.subr.mxu0 0.0
        %622 = vmatpush1.xpose.msra.mxu0 0.0
        %623 = vmatprep.subr.mxu0 0.0
        %624 = vmatpush1.xpose.msra.mxu0 0.0
        %625 = vmatprep.subr.mxu0 0.0
        %626 = vmatpush1.xpose.msra.mxu0 0.0
        %627 = vmatprep.subr.mxu0 0.0
        %628 = vmatpush1.xpose.msra.mxu0 0.0
        %629 = vmatprep.subr.mxu0 0.0
        %630 = vmatpush1.xpose.msra.mxu0 0.0
        %631 = vmatprep.subr.mxu0 0.0
        %632 = vmatpush1.xpose.msra.mxu0 0.0
        %633 = vmatprep.subr.mxu0 0.0
        %634 = vmatpush1.xpose.msra.mxu0 0.0
        %635 = vmatprep.subr.mxu0 0.0
        %636 = vmatpush1.xpose.msra.mxu0 0.0
        %637 = vmatprep.subr.mxu0 0.0
        %638 = vmatpush1.xpose.msra.mxu0 0.0
        %639 = vmatprep.subr.mxu0 0.0
        %640 = vmatpush1.xpose.msra.mxu0 0.0
        %641 = vmatprep.subr.mxu0 0.0
        %642 = vmatpush1.xpose.msra.mxu0 0.0
        %643 = vmatprep.mubr.f32.mxu0 0.0
        %644 = vmatmul.mubr.f32.gmra.mrb[0].mxu0 %v575
        %v645 = vpop.f32.mrb[0].mxu0
        %v646 = vadd.f32 0.0, %v645
        %v647 = vpop.f32.mrb[0].mxu0
        %648 = vdwg.mxu0
        %v649 = vsel %vm407, %v646, -inf
        %650 = vmax.xlane.f32.xlu0 %v649
        %v651 = vpop.xlane.xlu0 %650
        %v652 = vsub.f32 %v646, %v651
        %v653 = vmul.f32 %v652, 1.442695
        %v654 = vpow.pop %v653
        %v655 = vsel %vm407, %v654, 0.0
        %656 = vadd.xlane.f32.xlu0 %v655
        %v657 = vpop.xlane.xlu0 %656
        %v658 = vrcp.pop %v657
        %v659 = vmul.f32 %v654, %v658
        %660 = vrot.lane.b32.xlu0 %v400, 88
        %v661 = vpop.permute.xlu0 %660
        %v664 = vsel %vm407, %v659, 0
        %666 = vmatprep.subr.mxu0 0.0
        %667 = vmatpush1.msra.mxu0 %v661
        %668 = vmatprep.subr.mxu0 0.0
        %669 = vmatpush1.msra.mxu0 0.0
        %670 = vmatprep.subr.mxu0 0.0
        %671 = vmatpush1.msra.mxu0 0.0
        %672 = vmatprep.subr.mxu0 0.0
        %673 = vmatpush1.msra.mxu0 0.0
        %674 = vmatprep.subr.mxu0 0.0
        %675 = vmatpush1.msra.mxu0 0.0
        %676 = vmatprep.subr.mxu0 0.0
        %677 = vmatpush1.msra.mxu0 0.0
        %678 = vmatprep.subr.mxu0 0.0
        %679 = vmatpush1.msra.mxu0 0.0
        %680 = vmatprep.subr.mxu0 0.0
        %681 = vmatpush1.msra.mxu0 0.0
        %682 = vmatprep.subr.mxu0 0.0
        %683 = vmatpush1.msra.mxu0 0.0
        %684 = vmatprep.subr.mxu0 0.0
        %685 = vmatpush1.msra.mxu0 0.0
        %686 = vmatprep.subr.mxu0 0.0
        %687 = vmatpush1.msra.mxu0 0.0
        %688 = vmatprep.subr.mxu0 0.0
        %689 = vmatpush1.msra.mxu0 0.0
        %690 = vmatprep.subr.mxu0 0.0
        %691 = vmatpush1.msra.mxu0 0.0
        %692 = vmatprep.subr.mxu0 0.0
        %693 = vmatpush1.msra.mxu0 0.0
        %694 = vmatprep.subr.mxu0 0.0
        %695 = vmatpush1.msra.mxu0 0.0
        %696 = vmatprep.subr.mxu0 0.0
        %697 = vmatpush1.msra.mxu0 0.0
        %698 = vmatprep.subr.mxu0 0.0
        %699 = vmatpush1.msra.mxu0 0.0
        %700 = vmatprep.subr.mxu0 0.0
        %701 = vmatpush1.msra.mxu0 0.0
        %702 = vmatprep.subr.mxu0 0.0
        %703 = vmatpush1.msra.mxu0 0.0
        %704 = vmatprep.subr.mxu0 0.0
        %705 = vmatpush1.msra.mxu0 0.0
        %706 = vmatprep.subr.mxu0 0.0
        %707 = vmatpush1.msra.mxu0 0.0
        %708 = vmatprep.subr.mxu0 0.0
        %709 = vmatpush1.msra.mxu0 0.0
        %710 = vmatprep.subr.mxu0 0.0
        %711 = vmatpush1.msra.mxu0 0.0
        %712 = vmatprep.subr.mxu0 0.0
        %713 = vmatpush1.msra.mxu0 0.0
        %714 = vmatprep.subr.mxu0 0.0
        %715 = vmatpush1.msra.mxu0 0.0
        %716 = vmatprep.subr.mxu0 0.0
        %717 = vmatpush1.msra.mxu0 0.0
        %718 = vmatprep.subr.mxu0 0.0
        %719 = vmatpush1.msra.mxu0 0.0
        %720 = vmatprep.subr.mxu0 0.0
        %721 = vmatpush1.msra.mxu0 0.0
        %722 = vmatprep.subr.mxu0 0.0
        %723 = vmatpush1.msra.mxu0 0.0
        %724 = vmatprep.subr.mxu0 0.0
        %725 = vmatpush1.msra.mxu0 0.0
        %726 = vmatprep.subr.mxu0 0.0
        %727 = vmatpush1.msra.mxu0 0.0
        %728 = vmatprep.subr.mxu0 0.0
        %729 = vmatpush1.msra.mxu0 0.0
        %730 = vmatprep.mubr.f32.mxu0 0.0
        %731 = vmatmul.mubr.f32.gmra.mrb[0].mxu0 %v664
        %v732 = vpop.f32.mrb[0].mxu0
        %v733 = vadd.f32 0.0, %v732
        %v734 = vpop.f32.mrb[0].mxu0
        %735 = vdwg.mxu0
        %737 = vrot.lane.b32.xlu0 %v733, 8
        %v738 = vpop.permute.xlu0 %737
        %vm740 = vcmask 130112
        %741 = vst.msk [vmem:[#allocation3] sm:$0xff] %vm740, %v738
        %742 = vrot.lane.b32.xlu0 %v403, 80
        %v743 = vpop.permute.xlu0 %742
        %744 = vrot.lane.b32.xlu0 %v400, 72
        %v745 = vpop.permute.xlu0 %744
        %v746 = vsel %vm407, %v743, 0
        %v748 = vsel %vm407, %v745, 0
        %750 = vmatprep.subr.mxu0 0.0
        %751 = vmatpush1.xpose.msra.mxu0 %v748
        %752 = vmatprep.subr.mxu0 0.0
        %753 = vmatpush1.xpose.msra.mxu0 0.0
        %754 = vmatprep.subr.mxu0 0.0
        %755 = vmatpush1.xpose.msra.mxu0 0.0
        %756 = vmatprep.subr.mxu0 0.0
        %757 = vmatpush1.xpose.msra.mxu0 0.0
        %758 = vmatprep.subr.mxu0 0.0
        %759 = vmatpush1.xpose.msra.mxu0 0.0
        %760 = vmatprep.subr.mxu0 0.0
        %761 = vmatpush1.xpose.msra.mxu0 0.0
        %762 = vmatprep.subr.mxu0 0.0
        %763 = vmatpush1.xpose.msra.mxu0 0.0
        %764 = vmatprep.subr.mxu0 0.0
        %765 = vmatpush1.xpose.msra.mxu0 0.0
        %766 = vmatprep.subr.mxu0 0.0
        %767 = vmatpush1.xpose.msra.mxu0 0.0
        %768 = vmatprep.subr.mxu0 0.0
        %769 = vmatpush1.xpose.msra.mxu0 0.0
        %770 = vmatprep.subr.mxu0 0.0
        %771 = vmatpush1.xpose.msra.mxu0 0.0
        %772 = vmatprep.subr.mxu0 0.0
        %773 = vmatpush1.xpose.msra.mxu0 0.0
        %774 = vmatprep.subr.mxu0 0.0
        %775 = vmatpush1.xpose.msra.mxu0 0.0
        %776 = vmatprep.subr.mxu0 0.0
        %777 = vmatpush1.xpose.msra.mxu0 0.0
        %778 = vmatprep.subr.mxu0 0.0
        %779 = vmatpush1.xpose.msra.mxu0 0.0
        %780 = vmatprep.subr.mxu0 0.0
        %781 = vmatpush1.xpose.msra.mxu0 0.0
        %782 = vmatprep.subr.mxu0 0.0
        %783 = vmatpush1.xpose.msra.mxu0 0.0
        %784 = vmatprep.subr.mxu0 0.0
        %785 = vmatpush1.xpose.msra.mxu0 0.0
        %786 = vmatprep.subr.mxu0 0.0
        %787 = vmatpush1.xpose.msra.mxu0 0.0
        %788 = vmatprep.subr.mxu0 0.0
        %789 = vmatpush1.xpose.msra.mxu0 0.0
        %790 = vmatprep.subr.mxu0 0.0
        %791 = vmatpush1.xpose.msra.mxu0 0.0
        %792 = vmatprep.subr.mxu0 0.0
        %793 = vmatpush1.xpose.msra.mxu0 0.0
        %794 = vmatprep.subr.mxu0 0.0
        %795 = vmatpush1.xpose.msra.mxu0 0.0
        %796 = vmatprep.subr.mxu0 0.0
        %797 = vmatpush1.xpose.msra.mxu0 0.0
        %798 = vmatprep.subr.mxu0 0.0
        %799 = vmatpush1.xpose.msra.mxu0 0.0
        %800 = vmatprep.subr.mxu0 0.0
        %801 = vmatpush1.xpose.msra.mxu0 0.0
        %802 = vmatprep.subr.mxu0 0.0
        %803 = vmatpush1.xpose.msra.mxu0 0.0
        %804 = vmatprep.subr.mxu0 0.0
        %805 = vmatpush1.xpose.msra.mxu0 0.0
        %806 = vmatprep.subr.mxu0 0.0
        %807 = vmatpush1.xpose.msra.mxu0 0.0
        %808 = vmatprep.subr.mxu0 0.0
        %809 = vmatpush1.xpose.msra.mxu0 0.0
        %810 = vmatprep.subr.mxu0 0.0
        %811 = vmatpush1.xpose.msra.mxu0 0.0
        %812 = vmatprep.subr.mxu0 0.0
        %813 = vmatpush1.xpose.msra.mxu0 0.0
        %814 = vmatprep.mubr.f32.mxu0 0.0
        %815 = vmatmul.mubr.f32.gmra.mrb[0].mxu0 %v746
        %v816 = vpop.f32.mrb[0].mxu0
        %v817 = vadd.f32 0.0, %v816
        %v818 = vpop.f32.mrb[0].mxu0
        %819 = vdwg.mxu0
        %v820 = vsel %vm407, %v817, -inf
        %821 = vmax.xlane.f32.xlu0 %v820
        %v822 = vpop.xlane.xlu0 %821
        %v823 = vsub.f32 %v817, %v822
        %v824 = vmul.f32 %v823, 1.442695
        %v825 = vpow.pop %v824
        %v826 = vsel %vm407, %v825, 0.0
        %827 = vadd.xlane.f32.xlu0 %v826
        %v828 = vpop.xlane.xlu0 %827
        %v829 = vrcp.pop %v828
        %v830 = vmul.f32 %v825, %v829
        %831 = vrot.lane.b32.xlu0 %v400, 64
        %v832 = vpop.permute.xlu0 %831
        %v835 = vsel %vm407, %v830, 0
        %837 = vmatprep.subr.mxu0 0.0
        %838 = vmatpush1.msra.mxu0 %v832
        %839 = vmatprep.subr.mxu0 0.0
        %840 = vmatpush1.msra.mxu0 0.0
        %841 = vmatprep.subr.mxu0 0.0
        %842 = vmatpush1.msra.mxu0 0.0
        %843 = vmatprep.subr.mxu0 0.0
        %844 = vmatpush1.msra.mxu0 0.0
        %845 = vmatprep.subr.mxu0 0.0
        %846 = vmatpush1.msra.mxu0 0.0
        %847 = vmatprep.subr.mxu0 0.0
        %848 = vmatpush1.msra.mxu0 0.0
        %849 = vmatprep.subr.mxu0 0.0
        %850 = vmatpush1.msra.mxu0 0.0
        %851 = vmatprep.subr.mxu0 0.0
        %852 = vmatpush1.msra.mxu0 0.0
        %853 = vmatprep.subr.mxu0 0.0
        %854 = vmatpush1.msra.mxu0 0.0
        %855 = vmatprep.subr.mxu0 0.0
        %856 = vmatpush1.msra.mxu0 0.0
        %857 = vmatprep.subr.mxu0 0.0
        %858 = vmatpush1.msra.mxu0 0.0
        %859 = vmatprep.subr.mxu0 0.0
        %860 = vmatpush1.msra.mxu0 0.0
        %861 = vmatprep.subr.mxu0 0.0
        %862 = vmatpush1.msra.mxu0 0.0
        %863 = vmatprep.subr.mxu0 0.0
        %864 = vmatpush1.msra.mxu0 0.0
        %865 = vmatprep.subr.mxu0 0.0
        %866 = vmatpush1.msra.mxu0 0.0
        %867 = vmatprep.subr.mxu0 0.0
        %868 = vmatpush1.msra.mxu0 0.0
        %869 = vmatprep.subr.mxu0 0.0
        %870 = vmatpush1.msra.mxu0 0.0
        %871 = vmatprep.subr.mxu0 0.0
        %872 = vmatpush1.msra.mxu0 0.0
        %873 = vmatprep.subr.mxu0 0.0
        %874 = vmatpush1.msra.mxu0 0.0
        %875 = vmatprep.subr.mxu0 0.0
        %876 = vmatpush1.msra.mxu0 0.0
        %877 = vmatprep.subr.mxu0 0.0
        %878 = vmatpush1.msra.mxu0 0.0
        %879 = vmatprep.subr.mxu0 0.0
        %880 = vmatpush1.msra.mxu0 0.0
        %881 = vmatprep.subr.mxu0 0.0
        %882 = vmatpush1.msra.mxu0 0.0
        %883 = vmatprep.subr.mxu0 0.0
        %884 = vmatpush1.msra.mxu0 0.0
        %885 = vmatprep.subr.mxu0 0.0
        %886 = vmatpush1.msra.mxu0 0.0
        %887 = vmatprep.subr.mxu0 0.0
        %888 = vmatpush1.msra.mxu0 0.0
        %889 = vmatprep.subr.mxu0 0.0
        %890 = vmatpush1.msra.mxu0 0.0
        %891 = vmatprep.subr.mxu0 0.0
        %892 = vmatpush1.msra.mxu0 0.0
        %893 = vmatprep.subr.mxu0 0.0
        %894 = vmatpush1.msra.mxu0 0.0
        %895 = vmatprep.subr.mxu0 0.0
        %896 = vmatpush1.msra.mxu0 0.0
        %897 = vmatprep.subr.mxu0 0.0
        %898 = vmatpush1.msra.mxu0 0.0
        %899 = vmatprep.subr.mxu0 0.0
        %900 = vmatpush1.msra.mxu0 0.0
        %901 = vmatprep.mubr.f32.mxu0 0.0
        %902 = vmatmul.mubr.f32.gmra.mrb[0].mxu0 %v835
        %v903 = vpop.f32.mrb[0].mxu0
        %v904 = vadd.f32 0.0, %v903
        %v905 = vpop.f32.mrb[0].mxu0
        %906 = vdwg.mxu0
        %908 = vrot.lane.b32.xlu0 %v904, 16
        %v909 = vpop.permute.xlu0 %908
        %vm911 = vcmask 195712
        %912 = vst.msk [vmem:[#allocation3] sm:$0xff] %vm911, %v909
        %913 = vrot.lane.b32.xlu0 %v403, 56
        %v914 = vpop.permute.xlu0 %913
        %915 = vrot.lane.b32.xlu0 %v400, 48
        %v916 = vpop.permute.xlu0 %915
        %v917 = vsel %vm407, %v914, 0
        %v919 = vsel %vm407, %v916, 0
        %921 = vmatprep.subr.mxu0 0.0
        %922 = vmatpush1.xpose.msra.mxu0 %v919
        %923 = vmatprep.subr.mxu0 0.0
        %924 = vmatpush1.xpose.msra.mxu0 0.0
        %925 = vmatprep.subr.mxu0 0.0
        %926 = vmatpush1.xpose.msra.mxu0 0.0
        %927 = vmatprep.subr.mxu0 0.0
        %928 = vmatpush1.xpose.msra.mxu0 0.0
        %929 = vmatprep.subr.mxu0 0.0
        %930 = vmatpush1.xpose.msra.mxu0 0.0
        %931 = vmatprep.subr.mxu0 0.0
        %932 = vmatpush1.xpose.msra.mxu0 0.0
        %933 = vmatprep.subr.mxu0 0.0
        %934 = vmatpush1.xpose.msra.mxu0 0.0
        %935 = vmatprep.subr.mxu0 0.0
        %936 = vmatpush1.xpose.msra.mxu0 0.0
        %937 = vmatprep.subr.mxu0 0.0
        %938 = vmatpush1.xpose.msra.mxu0 0.0
        %939 = vmatprep.subr.mxu0 0.0
        %940 = vmatpush1.xpose.msra.mxu0 0.0
        %941 = vmatprep.subr.mxu0 0.0
        %942 = vmatpush1.xpose.msra.mxu0 0.0
        %943 = vmatprep.subr.mxu0 0.0
        %944 = vmatpush1.xpose.msra.mxu0 0.0
        %945 = vmatprep.subr.mxu0 0.0
        %946 = vmatpush1.xpose.msra.mxu0 0.0
        %947 = vmatprep.subr.mxu0 0.0
        %948 = vmatpush1.xpose.msra.mxu0 0.0
        %949 = vmatprep.subr.mxu0 0.0
        %950 = vmatpush1.xpose.msra.mxu0 0.0
        %951 = vmatprep.subr.mxu0 0.0
        %952 = vmatpush1.xpose.msra.mxu0 0.0
        %953 = vmatprep.subr.mxu0 0.0
        %954 = vmatpush1.xpose.msra.mxu0 0.0
        %955 = vmatprep.subr.mxu0 0.0
        %956 = vmatpush1.xpose.msra.mxu0 0.0
        %957 = vmatprep.subr.mxu0 0.0
        %958 = vmatpush1.xpose.msra.mxu0 0.0
        %959 = vmatprep.subr.mxu0 0.0
        %960 = vmatpush1.xpose.msra.mxu0 0.0
        %961 = vmatprep.subr.mxu0 0.0
        %962 = vmatpush1.xpose.msra.mxu0 0.0
        %963 = vmatprep.subr.mxu0 0.0
        %964 = vmatpush1.xpose.msra.mxu0 0.0
        %965 = vmatprep.subr.mxu0 0.0
        %966 = vmatpush1.xpose.msra.mxu0 0.0
        %967 = vmatprep.subr.mxu0 0.0
        %968 = vmatpush1.xpose.msra.mxu0 0.0
        %969 = vmatprep.subr.mxu0 0.0
        %970 = vmatpush1.xpose.msra.mxu0 0.0
        %971 = vmatprep.subr.mxu0 0.0
        %972 = vmatpush1.xpose.msra.mxu0 0.0
        %973 = vmatprep.subr.mxu0 0.0
        %974 = vmatpush1.xpose.msra.mxu0 0.0
        %975 = vmatprep.subr.mxu0 0.0
        %976 = vmatpush1.xpose.msra.mxu0 0.0
        %977 = vmatprep.subr.mxu0 0.0
        %978 = vmatpush1.xpose.msra.mxu0 0.0
        %979 = vmatprep.subr.mxu0 0.0
        %980 = vmatpush1.xpose.msra.mxu0 0.0
        %981 = vmatprep.subr.mxu0 0.0
        %982 = vmatpush1.xpose.msra.mxu0 0.0
        %983 = vmatprep.subr.mxu0 0.0
        %984 = vmatpush1.xpose.msra.mxu0 0.0
        %985 = vmatprep.mubr.f32.mxu0 0.0
        %986 = vmatmul.mubr.f32.gmra.mrb[0].mxu0 %v917
        %v987 = vpop.f32.mrb[0].mxu0
        %v988 = vadd.f32 0.0, %v987
        %v989 = vpop.f32.mrb[0].mxu0
        %990 = vdwg.mxu0
        %v991 = vsel %vm407, %v988, -inf
        %992 = vmax.xlane.f32.xlu0 %v991
        %v993 = vpop.xlane.xlu0 %992
        %v994 = vsub.f32 %v988, %v993
        %v995 = vmul.f32 %v994, 1.442695
        %v996 = vpow.pop %v995
        %v997 = vsel %vm407, %v996, 0.0
        %998 = vadd.xlane.f32.xlu0 %v997
        %v999 = vpop.xlane.xlu0 %998
        %v1000 = vrcp.pop %v999
        %v1001 = vmul.f32 %v996, %v1000
        %1002 = vrot.lane.b32.xlu0 %v400, 40
        %v1003 = vpop.permute.xlu0 %1002
        %v1006 = vsel %vm407, %v1001, 0
        %1008 = vmatprep.subr.mxu0 0.0
        %1009 = vmatpush1.msra.mxu0 %v1003
        %1010 = vmatprep.subr.mxu0 0.0
        %1011 = vmatpush1.msra.mxu0 0.0
        %1012 = vmatprep.subr.mxu0 0.0
        %1013 = vmatpush1.msra.mxu0 0.0
        %1014 = vmatprep.subr.mxu0 0.0
        %1015 = vmatpush1.msra.mxu0 0.0
        %1016 = vmatprep.subr.mxu0 0.0
        %1017 = vmatpush1.msra.mxu0 0.0
        %1018 = vmatprep.subr.mxu0 0.0
        %1019 = vmatpush1.msra.mxu0 0.0
        %1020 = vmatprep.subr.mxu0 0.0
        %1021 = vmatpush1.msra.mxu0 0.0
        %1022 = vmatprep.subr.mxu0 0.0
        %1023 = vmatpush1.msra.mxu0 0.0
        %1024 = vmatprep.subr.mxu0 0.0
        %1025 = vmatpush1.msra.mxu0 0.0
        %1026 = vmatprep.subr.mxu0 0.0
        %1027 = vmatpush1.msra.mxu0 0.0
        %1028 = vmatprep.subr.mxu0 0.0
        %1029 = vmatpush1.msra.mxu0 0.0
        %1030 = vmatprep.subr.mxu0 0.0
        %1031 = vmatpush1.msra.mxu0 0.0
        %1032 = vmatprep.subr.mxu0 0.0
        %1033 = vmatpush1.msra.mxu0 0.0
        %1034 = vmatprep.subr.mxu0 0.0
        %1035 = vmatpush1.msra.mxu0 0.0
        %1036 = vmatprep.subr.mxu0 0.0
        %1037 = vmatpush1.msra.mxu0 0.0
        %1038 = vmatprep.subr.mxu0 0.0
        %1039 = vmatpush1.msra.mxu0 0.0
        %1040 = vmatprep.subr.mxu0 0.0
        %1041 = vmatpush1.msra.mxu0 0.0
        %1042 = vmatprep.subr.mxu0 0.0
        %1043 = vmatpush1.msra.mxu0 0.0
        %1044 = vmatprep.subr.mxu0 0.0
        %1045 = vmatpush1.msra.mxu0 0.0
        %1046 = vmatprep.subr.mxu0 0.0
        %1047 = vmatpush1.msra.mxu0 0.0
        %1048 = vmatprep.subr.mxu0 0.0
        %1049 = vmatpush1.msra.mxu0 0.0
        %1050 = vmatprep.subr.mxu0 0.0
        %1051 = vmatpush1.msra.mxu0 0.0
        %1052 = vmatprep.subr.mxu0 0.0
        %1053 = vmatpush1.msra.mxu0 0.0
        %1054 = vmatprep.subr.mxu0 0.0
        %1055 = vmatpush1.msra.mxu0 0.0
        %1056 = vmatprep.subr.mxu0 0.0
        %1057 = vmatpush1.msra.mxu0 0.0
        %1058 = vmatprep.subr.mxu0 0.0
        %1059 = vmatpush1.msra.mxu0 0.0
        %1060 = vmatprep.subr.mxu0 0.0
        %1061 = vmatpush1.msra.mxu0 0.0
        %1062 = vmatprep.subr.mxu0 0.0
        %1063 = vmatpush1.msra.mxu0 0.0
        %1064 = vmatprep.subr.mxu0 0.0
        %1065 = vmatpush1.msra.mxu0 0.0
        %1066 = vmatprep.subr.mxu0 0.0
        %1067 = vmatpush1.msra.mxu0 0.0
        %1068 = vmatprep.subr.mxu0 0.0
        %1069 = vmatpush1.msra.mxu0 0.0
        %1070 = vmatprep.subr.mxu0 0.0
        %1071 = vmatpush1.msra.mxu0 0.0
        %1072 = vmatprep.mubr.f32.mxu0 0.0
        %1073 = vmatmul.mubr.f32.gmra.mrb[0].mxu0 %v1006
        %v1074 = vpop.f32.mrb[0].mxu0
        %v1075 = vadd.f32 0.0, %v1074
        %v1076 = vpop.f32.mrb[0].mxu0
        %1077 = vdwg.mxu0
        %1079 = vrot.lane.b32.xlu0 %v1075, 24
        %v1080 = vpop.permute.xlu0 %1079
        %vm1082 = vcmask 261312
        %1083 = vst.msk [vmem:[#allocation3] sm:$0xff] %vm1082, %v1080
        %v1084 = vld [vmem:[#allocation2] sm:$0xff]
        %v1085 = vld [vmem:[#allocation3] sm:$0xff]
        %v1086 = vld [vmem:[#allocation10] sm:$0xff]
        %v1087 = vld [vmem:[#allocation10 + $0x8] sm:$0xff]
        %v1088 = vld [vmem:[#allocation10 + $0x10] sm:$0xff]
        %v1089 = vld [vmem:[#allocation10 + $0x18] sm:$0xff]
        %v1091 = vsel %vm329, %v1085, 0
        %1093 = vmatprep.subr.mxu0 0.0
        %1094 = vmatpush1.msra.mxu0 %v1086
        %1095 = vmatprep.subr.mxu0 0.0
        %1096 = vmatpush1.msra.mxu0 %v1087
        %1097 = vmatprep.subr.mxu0 0.0
        %1098 = vmatpush1.msra.mxu0 %v1088
        %1099 = vmatprep.subr.mxu0 0.0
        %1100 = vmatpush1.msra.mxu0 %v1089
        %1101 = vmatprep.subr.mxu0 0.0
        %1102 = vmatpush1.msra.mxu0 0.0
        %1103 = vmatprep.subr.mxu0 0.0
        %1104 = vmatpush1.msra.mxu0 0.0
        %1105 = vmatprep.subr.mxu0 0.0
        %1106 = vmatpush1.msra.mxu0 0.0
        %1107 = vmatprep.subr.mxu0 0.0
        %1108 = vmatpush1.msra.mxu0 0.0
        %1109 = vmatprep.subr.mxu0 0.0
        %1110 = vmatpush1.msra.mxu0 0.0
        %1111 = vmatprep.subr.mxu0 0.0
        %1112 = vmatpush1.msra.mxu0 0.0
        %1113 = vmatprep.subr.mxu0 0.0
        %1114 = vmatpush1.msra.mxu0 0.0
        %1115 = vmatprep.subr.mxu0 0.0
        %1116 = vmatpush1.msra.mxu0 0.0
        %1117 = vmatprep.subr.mxu0 0.0
        %1118 = vmatpush1.msra.mxu0 0.0
        %1119 = vmatprep.subr.mxu0 0.0
        %1120 = vmatpush1.msra.mxu0 0.0
        %1121 = vmatprep.subr.mxu0 0.0
        %1122 = vmatpush1.msra.mxu0 0.0
        %1123 = vmatprep.subr.mxu0 0.0
        %1124 = vmatpush1.msra.mxu0 0.0
        %1125 = vmatprep.subr.mxu0 0.0
        %1126 = vmatpush1.msra.mxu0 0.0
        %1127 = vmatprep.subr.mxu0 0.0
        %1128 = vmatpush1.msra.mxu0 0.0
        %1129 = vmatprep.subr.mxu0 0.0
        %1130 = vmatpush1.msra.mxu0 0.0
        %1131 = vmatprep.subr.mxu0 0.0
        %1132 = vmatpush1.msra.mxu0 0.0
        %1133 = vmatprep.subr.mxu0 0.0
        %1134 = vmatpush1.msra.mxu0 0.0
        %1135 = vmatprep.subr.mxu0 0.0
        %1136 = vmatpush1.msra.mxu0 0.0
        %1137 = vmatprep.subr.mxu0 0.0
        %1138 = vmatpush1.msra.mxu0 0.0
        %1139 = vmatprep.subr.mxu0 0.0
        %1140 = vmatpush1.msra.mxu0 0.0
        %1141 = vmatprep.subr.mxu0 0.0
        %1142 = vmatpush1.msra.mxu0 0.0
        %1143 = vmatprep.subr.mxu0 0.0
        %1144 = vmatpush1.msra.mxu0 0.0
        %1145 = vmatprep.subr.mxu0 0.0
        %1146 = vmatpush1.msra.mxu0 0.0
        %1147 = vmatprep.subr.mxu0 0.0
        %1148 = vmatpush1.msra.mxu0 0.0
        %1149 = vmatprep.subr.mxu0 0.0
        %1150 = vmatpush1.msra.mxu0 0.0
        %1151 = vmatprep.subr.mxu0 0.0
        %1152 = vmatpush1.msra.mxu0 0.0
        %1153 = vmatprep.subr.mxu0 0.0
        %1154 = vmatpush1.msra.mxu0 0.0
        %1155 = vmatprep.subr.mxu0 0.0
        %1156 = vmatpush1.msra.mxu0 0.0
        %1157 = vmatprep.mubr.f32.mxu0 0.0
        %1158 = vmatmul.mubr.f32.gmra.mrb[0].mxu0 %v1091
        %v1159 = vpop.f32.mrb[0].mxu0
        %v1160 = vadd.f32 0.0, %v1159
        %v1161 = vpop.f32.mrb[0].mxu0
        %1162 = vdwg.mxu0
        %v1163 = vadd.f32 %v1084, %v1160
        %1164 = vst.msk [vmem:[#allocation2] sm:$0xff] %vm329, %v1163
        // Predicated region
        $region57: #{tpu_custom_call.1} parent=39 // pred_check
          %p1165 = pneg %p311
        $region58: #{tpu_custom_call.1} parent=39 // pred_check_branch
          %1167 = sbr.rel (%p1165) target = $region60
        $region59: #{tpu_custom_call.1} parent=39 // pred_region
          %v1168 = vld [vmem:[#allocation2] sm:$0xff]
          %v1169 = vld [vmem:[%s4] sm:$0x1]
          %v1171 = vlaneseq
          %v1172 = vshrl.u32 %v1171, 7
          %v1173 = vsub.s32 0, %v1172
          %v1174 = vrot.slane %v1169, %v1173
          %v1176 = vadd.f32 %v1168, %v1174
          %1177 = vst.msk [vmem:[%s307] sm:$0xff] %vm329, %v1176
        $region60: #{tpu_custom_call.1} parent=39 // pred_fallthru
          _
        %s1178 = sand.u32 %s168, 1
        %s1179 = scalar_lea.sflag [#allocation7], %s1178
        %s1180 = sand.u32 %s168, 1
        %s1181 = smul.addr %s1180, 8
        %s1182 = scalar_lea.vmem [#allocation11], %s1181
        // Predicated region
        $region61: #{tpu_custom_call.1} parent=39 // pred_check
          %p1183 = pneg %p178
        $region62: #{tpu_custom_call.1} parent=39 // pred_check_branch
          %1185 = sbr.rel (%p1183) target = $region64
        $region63: #{tpu_custom_call.1} parent=39 // pred_region
          %s1187 = ssub.s32 128, 128
          %1188 = vsyncadd %s1179, %s1187
          %s1189 = smul.addr %s27, 128
          %s1190 = scalar_lea.hbm %s5, %s1189
          %s1192 = sshll.u32 %s1182, 4
          %s1193 = int_to_ptr.vmem [resolvable:$true] %s1192
          %1195 = dma.vmem_to_hbm [thread:$0]  %s1193, 128, %s1190, %s1179
        $region64: #{tpu_custom_call.1} parent=39 // pred_fallthru
          _
      $region40: #{tpu_custom_call.1} parent=5 // pred_fallthru
        _
      %p1196 = scmp.le.s32.totalorder 2, %s18
      // Predicated region
      $region65: #{tpu_custom_call.1} parent=5 // pred_check
        %p1197 = pneg %p1196
      $region66: #{tpu_custom_call.1} parent=5 // pred_check_branch
        %1199 = sbr.rel (%p1197) target = $region68
      $region67: #{tpu_custom_call.1} parent=5 // pred_region
        %s1200 = ssub.s32 %s18, 2
        // Predicated region
        $region69: #{tpu_custom_call.1} parent=67 // pred_check
          %p1201 = pneg %p184
        $region70: #{tpu_custom_call.1} parent=67 // pred_check_branch
          %1203 = sbr.rel (%p1201) target = $region72
        $region71: #{tpu_custom_call.1} parent=67 // pred_region
          %s1204 = sand.u32 %s169, 1
          %s1205 = scalar_lea.sflag [#allocation7], %s1204
          %s1206 = sand.u32 %s169, 1
          %s1207 = smul.addr %s1206, 8
          %s1208 = scalar_lea.vmem [#allocation11], %s1207
          %1209 = dma.done %s1205, 128
        $region72: #{tpu_custom_call.1} parent=67 // pred_fallthru
          _
      $region68: #{tpu_custom_call.1} parent=5 // pred_fallthru
        _
    $region6: #{tpu_custom_call.1} parent=1 // loop_footer
      %s22 = sadd.s32 1, %s18
    $region7: #{tpu_custom_call.1} parent=1 // loop_footer_branch
      %17 = sbr.rel target = $region3
    $region8: #{tpu_custom_call.1} parent=1 // loop_exit
      _
    %1210 = vsyncpa [#allocation6], 1
    %s1211 = scalar_lea.sflag [#allocation6], 1
    %1212 = vsyncpa %s1211, 1
    %1213 = vsyncpa [#allocation9], 1
    %1214 = vsyncpa [#allocation7], 1
    %s1215 = scalar_lea.sflag [#allocation7], 1
    %1216 = vsyncpa %s1215, 1

</llo_original>
